<compile_context>
chip_gen: v7x
topology: tpu7x:2x2x1
jax: 0.10.0
libtpu: 0.0.40
codegen_flags: <defaults>
</compile_context>

<pallas_src>
import math
import functools

import jax
import jax.numpy as jnp
from jax import lax
from jax.experimental import pallas as pl
from jax.experimental.pallas import tpu as pltpu

EPS = 1e-6
NEG_INF = -1e9


def _layernorm(x, gamma, beta):
    mu = jnp.mean(x, axis=-1, keepdims=True)
    var = jnp.mean((x - mu) ** 2, axis=-1, keepdims=True)
    return (x - mu) * lax.rsqrt(var + EPS) * gamma + beta


def transformer_block_kernel(x_ref, mask_ref,
                             wq_ref, bq_ref, wk_ref, bk_ref, wv_ref, bv_ref,
                             wo_ref, bo_ref,
                             w1_ref, b1_ref, w2_ref, b2_ref,
                             g1_ref, be1_ref, g2_ref, be2_ref,
                             o_ref,
                             ctx_ref,
                             *, heads, d_k, tq):
    qi = pl.program_id(1)
    q_start = pl.multiple_of(qi * tq, tq)

    x_full = x_ref[0]                           # (S, H) f32, whole sequence (for K/V)
    x_q = x_ref[0, pl.ds(q_start, tq), :]       # (TQ, H) f32, this query tile
    mask = mask_ref[0]                          # (TQ, S) int32

    g1, be1 = g1_ref[...], be1_ref[...]

    # ---- sublayer 1: x + MHA(LayerNorm(x)) --------------------------------
    h_kv = _layernorm(x_full, g1, be1).astype(jnp.bfloat16)   # K/V source (f32 LN)
    h_q = _layernorm(x_q, g1, be1).astype(jnp.bfloat16)       # Q source

    # QKV projections: bf16 operands, f32 accumulation on the MXU.
    k = jnp.dot(h_kv, wk_ref[...], preferred_element_type=jnp.float32) + bk_ref[...]
    v = jnp.dot(h_kv, wv_ref[...], preferred_element_type=jnp.float32) + bv_ref[...]
    q = jnp.dot(h_q, wq_ref[...], preferred_element_type=jnp.float32) + bq_ref[...]
    q = q * (1.0 / math.sqrt(d_k))              # fold 1/sqrt(d_k) into q (applied once)

    q_b = q.astype(jnp.bfloat16)
    k_b = k.astype(jnp.bfloat16)
    v_b = v.astype(jnp.bfloat16)

    # Additive mask bias, computed ONCE (hoisted out of the per-head loop).
    bias = jnp.where(mask == 0, NEG_INF, 0.0)   # (TQ, S) f32

    # Static unrolled loop over heads: dot_general contracts the shared d_k
    # axis directly (no materialized transpose), per-head contexts go into a
    # VMEM slab (no concatenate).
    dn = (((1,), (1,)), ((), ()))
    for hd in range(heads):
        sl = slice(hd * d_k, (hd + 1) * d_k)
        s = lax.dot_general(q_b[:, sl], k_b[:, sl], dn,
                            preferred_element_type=jnp.float32)      # (TQ, S)
        s = s + bias
        s = s - jnp.max(s, axis=-1, keepdims=True)
        p = jnp.exp(s)
        # reciprocal-multiply on the EUP instead of a VALU divide
        p = p * pl.reciprocal(jnp.sum(p, axis=-1, keepdims=True), approx=True)
        ctx_ref[:, sl] = jnp.dot(p.astype(jnp.bfloat16), v_b[:, sl],
                                 preferred_element_type=jnp.float32)  # (TQ, d_k)

    attn = jnp.dot(ctx_ref[...].astype(jnp.bfloat16), wo_ref[...],
                   preferred_element_type=jnp.float32) + bo_ref[...]
    # TODO(synk): dropout layers are identity here (eval-mode semantics).
    x1 = x_q + attn

    # ---- sublayer 2: x + FFN(LayerNorm(x)) --------------------------------
    h2 = _layernorm(x1, g2_ref[...], be2_ref[...]).astype(jnp.bfloat16)
    f = jnp.dot(h2, w1_ref[...], preferred_element_type=jnp.float32) + b1_ref[...]
    f = jnp.maximum(f, 0.0)                                   # ReLU in f32
    f = jnp.dot(f.astype(jnp.bfloat16), w2_ref[...],
                preferred_element_type=jnp.float32) + b2_ref[...]

    o_ref[0] = (x1 + f).astype(o_ref.dtype)


def transformer_block(x, mask, params, *, heads, tq=None):
    B, S, H = x.shape
    assert H % heads == 0
    d_k = H // heads
    if tq is None:
        tq = S if S <= 128 else 128               # query-tile rows
    assert S % tq == 0
    n_q = S // tq

    (wq, bq, wk, bk, wv, bv, wo, bo, w1, b1, w2, b2, g1, be1, g2, be2) = params
    bf = jnp.bfloat16
    # Weights in bf16 (MXU rate + half the weight DMA); biases / LN params stay f32.
    params2 = [wq.astype(bf), bq, wk.astype(bf), bk, wv.astype(bf), bv,
               wo.astype(bf), bo, w1.astype(bf), b1, w2.astype(bf), b2,
               g1, be1, g2, be2]

    kernel = functools.partial(transformer_block_kernel,
                               heads=heads, d_k=d_k, tq=tq)

    in_specs = [
        # full-sequence x per batch (needed for K/V); block index only changes
        # with b, so it is not re-DMA'd across query tiles.
        pl.BlockSpec((1, S, H), lambda b, qi: (b, 0, 0)),
        # mask rows for this query tile only
        pl.BlockSpec((1, tq, S), lambda b, qi: (b, qi, 0)),
    ] + [
        pl.BlockSpec(p.shape, lambda b, qi: (0, 0))   # grid-invariant 2-D params
        for p in params2
    ]
    out_spec = pl.BlockSpec((1, tq, H), lambda b, qi: (b, qi, 0))

    return pl.pallas_call(
        kernel,
        out_shape=jax.ShapeDtypeStruct((B, S, H), jnp.float32),
        grid=(B, n_q),
        in_specs=in_specs,
        out_specs=out_spec,
        scratch_shapes=[pltpu.VMEM((tq, H), jnp.float32)],   # per-head context slab
        compiler_params=pltpu.CompilerParams(
            dimension_semantics=("parallel", "parallel"),     # both TCs on v7x
            vmem_limit_bytes=48 * 1024 * 1024,                # < 64 MiB (v7x)
        ),
    )(x, mask, *params2)


if __name__ == "__main__":
    B, S, H, HEADS, FF = 2, 8, 32, 4, 128   # hidden=32, attn_heads=4, ffn=4*hidden

    key = jax.random.PRNGKey(0)
    ks = jax.random.split(key, 16)

    def lin_w(k, din, dout):
        bound = 1.0 / math.sqrt(din)
        return jax.random.uniform(k, (din, dout), jnp.float32, -bound, bound)

    def lin_b(k, din, dout):
        bound = 1.0 / math.sqrt(din)
        return jax.random.uniform(k, (1, dout), jnp.float32, -bound, bound)

    wq, bq = lin_w(ks[0], H, H), lin_b(ks[1], H, H)
    wk, bk = lin_w(ks[2], H, H), lin_b(ks[3], H, H)
    wv, bv = lin_w(ks[4], H, H), lin_b(ks[5], H, H)
    wo, bo = lin_w(ks[6], H, H), lin_b(ks[7], H, H)
    w1, b1 = lin_w(ks[8], H, FF), lin_b(ks[9], H, FF)
    w2, b2 = lin_w(ks[10], FF, H), lin_b(ks[11], FF, H)
    g1, be1 = jnp.ones((1, H), jnp.float32), jnp.zeros((1, H), jnp.float32)
    g2, be2 = jnp.ones((1, H), jnp.float32), jnp.zeros((1, H), jnp.float32)

    params = [wq, bq, wk, bk, wv, bv, wo, bo, w1, b1, w2, b2, g1, be1, g2, be2]

    x = jax.random.normal(ks[12], (B, S, H), jnp.float32)
    mask = jnp.broadcast_to(jnp.tril(jnp.ones((S, S), jnp.int32)), (B, S, S))

    out = transformer_block(x, mask, params, heads=HEADS)
    jax.block_until_ready(out)
    assert out.shape == (B, S, H)
    print("KERNEL_OK")
</pallas_src>

<mosaic_0001>
module attributes {stable_mosaic.version = 11 : i64} {
  func.func @transformer_block_kernel(%arg0: i32, %arg1: i32, %arg2: memref<1x8x32xf32, #tpu.memory_space<vmem>>, %arg3: memref<1x8x8xi32, #tpu.memory_space<vmem>>, %arg4: memref<32x32xbf16, #tpu.memory_space<vmem>>, %arg5: memref<1x32xf32, #tpu.memory_space<vmem>>, %arg6: memref<32x32xbf16, #tpu.memory_space<vmem>>, %arg7: memref<1x32xf32, #tpu.memory_space<vmem>>, %arg8: memref<32x32xbf16, #tpu.memory_space<vmem>>, %arg9: memref<1x32xf32, #tpu.memory_space<vmem>>, %arg10: memref<32x32xbf16, #tpu.memory_space<vmem>>, %arg11: memref<1x32xf32, #tpu.memory_space<vmem>>, %arg12: memref<32x128xbf16, #tpu.memory_space<vmem>>, %arg13: memref<1x128xf32, #tpu.memory_space<vmem>>, %arg14: memref<128x32xbf16, #tpu.memory_space<vmem>>, %arg15: memref<1x32xf32, #tpu.memory_space<vmem>>, %arg16: memref<1x32xf32, #tpu.memory_space<vmem>>, %arg17: memref<1x32xf32, #tpu.memory_space<vmem>>, %arg18: memref<1x32xf32, #tpu.memory_space<vmem>>, %arg19: memref<1x32xf32, #tpu.memory_space<vmem>>, %arg20: memref<1x8x32xf32, #tpu.memory_space<vmem>>, %arg21: memref<8x32xf32, #tpu.memory_space<vmem>>) attributes {dimension_semantics = [#tpu.dimension_semantics<parallel>, #tpu.dimension_semantics<parallel>], iteration_bounds = array<i64: 2, 1>, scalar_prefetch = 0 : i64, scratch_operands = 1 : i64, tpu.core_type = #tpu.core_type<tc>, window_params = [{transform_indices = @transform_0, window_bounds = array<i64: 1, 8, 32>}, {transform_indices = @transform_1, window_bounds = array<i64: 1, 8, 8>}, {pipeline_mode = #tpu.pipeline_mode<synchronous>, transform_indices = @transform_2, window_bounds = array<i64: 32, 32>}, {pipeline_mode = #tpu.pipeline_mode<synchronous>, transform_indices = @transform_3, window_bounds = array<i64: 1, 32>}, {pipeline_mode = #tpu.pipeline_mode<synchronous>, transform_indices = @transform_4, window_bounds = array<i64: 32, 32>}, {pipeline_mode = #tpu.pipeline_mode<synchronous>, transform_indices = @transform_5, window_bounds = array<i64: 1, 32>}, {pipeline_mode = #tpu.pipeline_mode<synchronous>, transform_indices = @transform_6, window_bounds = array<i64: 32, 32>}, {pipeline_mode = #tpu.pipeline_mode<synchronous>, transform_indices = @transform_7, window_bounds = array<i64: 1, 32>}, {pipeline_mode = #tpu.pipeline_mode<synchronous>, transform_indices = @transform_8, window_bounds = array<i64: 32, 32>}, {pipeline_mode = #tpu.pipeline_mode<synchronous>, transform_indices = @transform_9, window_bounds = array<i64: 1, 32>}, {pipeline_mode = #tpu.pipeline_mode<synchronous>, transform_indices = @transform_10, window_bounds = array<i64: 32, 128>}, {pipeline_mode = #tpu.pipeline_mode<synchronous>, transform_indices = @transform_11, window_bounds = array<i64: 1, 128>}, {pipeline_mode = #tpu.pipeline_mode<synchronous>, transform_indices = @transform_12, window_bounds = array<i64: 128, 32>}, {pipeline_mode = #tpu.pipeline_mode<synchronous>, transform_indices = @transform_13, window_bounds = array<i64: 1, 32>}, {pipeline_mode = #tpu.pipeline_mode<synchronous>, transform_indices = @transform_14, window_bounds = array<i64: 1, 32>}, {pipeline_mode = #tpu.pipeline_mode<synchronous>, transform_indices = @transform_15, window_bounds = array<i64: 1, 32>}, {pipeline_mode = #tpu.pipeline_mode<synchronous>, transform_indices = @transform_16, window_bounds = array<i64: 1, 32>}, {pipeline_mode = #tpu.pipeline_mode<synchronous>, transform_indices = @transform_17, window_bounds = array<i64: 1, 32>}, {transform_indices = @transform_18, window_bounds = array<i64: 1, 8, 32>}]} {
    %c8_i32 = arith.constant 8 : i32
    %0 = arith.muli %arg1, %c8_i32 : i32
    %1 = tpu.assume_multiple %0, 8 : i32
    %c0 = arith.constant 0 : index
    %c0_0 = arith.constant 0 : index
    %c0_1 = arith.constant 0 : index
    %2 = vector.load %arg2[%c0, %c0_0, %c0_1] : memref<1x8x32xf32, #tpu.memory_space<vmem>>, vector<1x8x32xf32>
    %3 = vector.shape_cast %2 : vector<1x8x32xf32> to vector<8x32xf32>
    %c0_2 = arith.constant 0 : index
    %4 = arith.index_cast %1 : i32 to index
    %c0_3 = arith.constant 0 : index
    %5 = vector.load %arg2[%c0_2, %4, %c0_3] : memref<1x8x32xf32, #tpu.memory_space<vmem>>, vector<1x8x32xf32>
    %6 = vector.shape_cast %5 : vector<1x8x32xf32> to vector<8x32xf32>
    %c0_4 = arith.constant 0 : index
    %c0_5 = arith.constant 0 : index
    %c0_6 = arith.constant 0 : index
    %7 = vector.load %arg3[%c0_4, %c0_5, %c0_6] : memref<1x8x8xi32, #tpu.memory_space<vmem>>, vector<1x8x8xi32>
    %8 = vector.shape_cast %7 : vector<1x8x8xi32> to vector<8x8xi32>
    %c0_7 = arith.constant 0 : index
    %c0_8 = arith.constant 0 : index
    %9 = vector.load %arg16[%c0_7, %c0_8] : memref<1x32xf32, #tpu.memory_space<vmem>>, vector<1x32xf32>
    %c0_9 = arith.constant 0 : index
    %c0_10 = arith.constant 0 : index
    %10 = vector.load %arg17[%c0_9, %c0_10] : memref<1x32xf32, #tpu.memory_space<vmem>>, vector<1x32xf32>
    %cst = arith.constant dense<0.000000e+00> : vector<8xf32>
    %11 = vector.multi_reduction <add>, %3, %cst [1] : vector<8x32xf32> to vector<8xf32>
    %12 = vector.shape_cast %11 : vector<8xf32> to vector<8x1xf32>
    %cst_11 = arith.constant 3.200000e+01 : f32
    %13 = vector.broadcast %cst_11 : f32 to vector<8x1xf32>
    %14 = arith.divf %12, %13 : vector<8x1xf32>
    %15 = vector.broadcast %14 : vector<8x1xf32> to vector<8x32xf32>
    %16 = arith.subf %3, %15 : vector<8x32xf32>
    %17 = arith.mulf %16, %16 : vector<8x32xf32>
    %cst_12 = arith.constant dense<0.000000e+00> : vector<8xf32>
    %18 = vector.multi_reduction <add>, %17, %cst_12 [1] : vector<8x32xf32> to vector<8xf32>
    %19 = vector.shape_cast %18 : vector<8xf32> to vector<8x1xf32>
    %cst_13 = arith.constant 3.200000e+01 : f32
    %20 = vector.broadcast %cst_13 : f32 to vector<8x1xf32>
    %21 = arith.divf %19, %20 : vector<8x1xf32>
    %22 = vector.broadcast %14 : vector<8x1xf32> to vector<8x32xf32>
    %23 = arith.subf %3, %22 : vector<8x32xf32>
    %cst_14 = arith.constant 9.99999997E-7 : f32
    %24 = vector.broadcast %cst_14 : f32 to vector<8x1xf32>
    %25 = arith.addf %21, %24 : vector<8x1xf32>
    %26 = math.rsqrt %25 : vector<8x1xf32>
    %27 = vector.broadcast %26 : vector<8x1xf32> to vector<8x32xf32>
    %28 = arith.mulf %23, %27 : vector<8x32xf32>
    %29 = vector.broadcast %9 : vector<1x32xf32> to vector<8x32xf32>
    %30 = arith.mulf %28, %29 : vector<8x32xf32>
    %31 = vector.broadcast %10 : vector<1x32xf32> to vector<8x32xf32>
    %32 = arith.addf %30, %31 : vector<8x32xf32>
    %33 = arith.truncf %32 : vector<8x32xf32> to vector<8x32xbf16>
    %cst_15 = arith.constant dense<0.000000e+00> : vector<8xf32>
    %34 = vector.multi_reduction <add>, %6, %cst_15 [1] : vector<8x32xf32> to vector<8xf32>
    %35 = vector.shape_cast %34 : vector<8xf32> to vector<8x1xf32>
    %cst_16 = arith.constant 3.200000e+01 : f32
    %36 = vector.broadcast %cst_16 : f32 to vector<8x1xf32>
    %37 = arith.divf %35, %36 : vector<8x1xf32>
    %38 = vector.broadcast %37 : vector<8x1xf32> to vector<8x32xf32>
    %39 = arith.subf %6, %38 : vector<8x32xf32>
    %40 = arith.mulf %39, %39 : vector<8x32xf32>
    %cst_17 = arith.constant dense<0.000000e+00> : vector<8xf32>
    %41 = vector.multi_reduction <add>, %40, %cst_17 [1] : vector<8x32xf32> to vector<8xf32>
    %42 = vector.shape_cast %41 : vector<8xf32> to vector<8x1xf32>
    %cst_18 = arith.constant 3.200000e+01 : f32
    %43 = vector.broadcast %cst_18 : f32 to vector<8x1xf32>
    %44 = arith.divf %42, %43 : vector<8x1xf32>
    %45 = vector.broadcast %37 : vector<8x1xf32> to vector<8x32xf32>
    %46 = arith.subf %6, %45 : vector<8x32xf32>
    %cst_19 = arith.constant 9.99999997E-7 : f32
    %47 = vector.broadcast %cst_19 : f32 to vector<8x1xf32>
    %48 = arith.addf %44, %47 : vector<8x1xf32>
    %49 = math.rsqrt %48 : vector<8x1xf32>
    %50 = vector.broadcast %49 : vector<8x1xf32> to vector<8x32xf32>
    %51 = arith.mulf %46, %50 : vector<8x32xf32>
    %52 = vector.broadcast %9 : vector<1x32xf32> to vector<8x32xf32>
    %53 = arith.mulf %51, %52 : vector<8x32xf32>
    %54 = vector.broadcast %10 : vector<1x32xf32> to vector<8x32xf32>
    %55 = arith.addf %53, %54 : vector<8x32xf32>
    %56 = arith.truncf %55 : vector<8x32xf32> to vector<8x32xbf16>
    %c0_20 = arith.constant 0 : index
    %c0_21 = arith.constant 0 : index
    %57 = vector.load %arg6[%c0_20, %c0_21] : memref<32x32xbf16, #tpu.memory_space<vmem>>, vector<32x32xbf16>
    %cst_22 = arith.constant dense<0.000000e+00> : vector<8x32xf32>
    %58 = tpu.matmul %33, %57, %cst_22 {dimension_numbers = #tpu.dot_dimension_numbers<[1], [0], [0], [1], [0, 0, 1, 1], [], []>} : vector<8x32xbf16>, vector<32x32xbf16>, vector<8x32xf32> -> vector<8x32xf32>
    %c0_23 = arith.constant 0 : index
    %c0_24 = arith.constant 0 : index
    %59 = vector.load %arg7[%c0_23, %c0_24] : memref<1x32xf32, #tpu.memory_space<vmem>>, vector<1x32xf32>
    %60 = vector.broadcast %59 : vector<1x32xf32> to vector<8x32xf32>
    %61 = arith.addf %58, %60 : vector<8x32xf32>
    %c0_25 = arith.constant 0 : index
    %c0_26 = arith.constant 0 : index
    %62 = vector.load %arg8[%c0_25, %c0_26] : memref<32x32xbf16, #tpu.memory_space<vmem>>, vector<32x32xbf16>
    %cst_27 = arith.constant dense<0.000000e+00> : vector<8x32xf32>
    %63 = tpu.matmul %33, %62, %cst_27 {dimension_numbers = #tpu.dot_dimension_numbers<[1], [0], [0], [1], [0, 0, 1, 1], [], []>} : vector<8x32xbf16>, vector<32x32xbf16>, vector<8x32xf32> -> vector<8x32xf32>
    %c0_28 = arith.constant 0 : index
    %c0_29 = arith.constant 0 : index
    %64 = vector.load %arg9[%c0_28, %c0_29] : memref<1x32xf32, #tpu.memory_space<vmem>>, vector<1x32xf32>
    %65 = vector.broadcast %64 : vector<1x32xf32> to vector<8x32xf32>
    %66 = arith.addf %63, %65 : vector<8x32xf32>
    %c0_30 = arith.constant 0 : index
    %c0_31 = arith.constant 0 : index
    %67 = vector.load %arg4[%c0_30, %c0_31] : memref<32x32xbf16, #tpu.memory_space<vmem>>, vector<32x32xbf16>
    %cst_32 = arith.constant dense<0.000000e+00> : vector<8x32xf32>
    %68 = tpu.matmul %56, %67, %cst_32 {dimension_numbers = #tpu.dot_dimension_numbers<[1], [0], [0], [1], [0, 0, 1, 1], [], []>} : vector<8x32xbf16>, vector<32x32xbf16>, vector<8x32xf32> -> vector<8x32xf32>
    %c0_33 = arith.constant 0 : index
    %c0_34 = arith.constant 0 : index
    %69 = vector.load %arg5[%c0_33, %c0_34] : memref<1x32xf32, #tpu.memory_space<vmem>>, vector<1x32xf32>
    %70 = vector.broadcast %69 : vector<1x32xf32> to vector<8x32xf32>
    %71 = arith.addf %68, %70 : vector<8x32xf32>
    %cst_35 = arith.constant 0.353553385 : f32
    %72 = vector.broadcast %cst_35 : f32 to vector<8x32xf32>
    %73 = arith.mulf %71, %72 : vector<8x32xf32>
    %74 = arith.truncf %73 : vector<8x32xf32> to vector<8x32xbf16>
    %75 = arith.truncf %61 : vector<8x32xf32> to vector<8x32xbf16>
    %76 = arith.truncf %66 : vector<8x32xf32> to vector<8x32xbf16>
    %c0_i32 = arith.constant 0 : i32
    %77 = vector.broadcast %c0_i32 : i32 to vector<8x8xi32>
    %78 = arith.cmpi eq, %8, %77 : vector<8x8xi32>
    %cst_36 = arith.constant -1.000000e+09 : f32
    %cst_37 = arith.constant 0.000000e+00 : f32
    %79 = vector.broadcast %cst_36 : f32 to vector<8x8xf32>
    %80 = vector.broadcast %cst_37 : f32 to vector<8x8xf32>
    %81 = arith.select %78, %79, %80 : vector<8x8xi1>, vector<8x8xf32>
    %82 = vector.extract_strided_slice %74 {offsets = [0, 0], sizes = [8, 8], strides = [1, 1]} : vector<8x32xbf16> to vector<8x8xbf16>
    %83 = vector.extract_strided_slice %75 {offsets = [0, 0], sizes = [8, 8], strides = [1, 1]} : vector<8x32xbf16> to vector<8x8xbf16>
    %cst_38 = arith.constant dense<0.000000e+00> : vector<8x8xf32>
    %84 = tpu.matmul %82, %83, %cst_38 {dimension_numbers = #tpu.dot_dimension_numbers<[1], [1], [0], [0], [0, 0, 1, 0], [], []>} : vector<8x8xbf16>, vector<8x8xbf16>, vector<8x8xf32> -> vector<8x8xf32>
    %85 = arith.addf %84, %81 : vector<8x8xf32>
    %cst_39 = arith.constant dense<0xFF800000> : vector<8xf32>
    %86 = vector.multi_reduction <maximumf>, %85, %cst_39 [1] : vector<8x8xf32> to vector<8xf32>
    %87 = vector.shape_cast %86 : vector<8xf32> to vector<8x1xf32>
    %88 = vector.broadcast %87 : vector<8x1xf32> to vector<8x8xf32>
    %89 = arith.subf %85, %88 : vector<8x8xf32>
    %90 = math.exp %89 : vector<8x8xf32>
    %cst_40 = arith.constant dense<0.000000e+00> : vector<8xf32>
    %91 = vector.multi_reduction <add>, %90, %cst_40 [1] : vector<8x8xf32> to vector<8xf32>
    %92 = vector.shape_cast %91 : vector<8xf32> to vector<8x1xf32>
    %93 = tpu.reciprocal %92 {approx = true} : vector<8x1xf32> -> vector<8x1xf32>
    %94 = vector.broadcast %93 : vector<8x1xf32> to vector<8x8xf32>
    %95 = arith.mulf %90, %94 : vector<8x8xf32>
    %96 = arith.truncf %95 : vector<8x8xf32> to vector<8x8xbf16>
    %97 = vector.extract_strided_slice %76 {offsets = [0, 0], sizes = [8, 8], strides = [1, 1]} : vector<8x32xbf16> to vector<8x8xbf16>
    %cst_41 = arith.constant dense<0.000000e+00> : vector<8x8xf32>
    %98 = tpu.matmul %96, %97, %cst_41 {dimension_numbers = #tpu.dot_dimension_numbers<[1], [0], [0], [1], [0, 0, 1, 1], [], []>} : vector<8x8xbf16>, vector<8x8xbf16>, vector<8x8xf32> -> vector<8x8xf32>
    %c0_42 = arith.constant 0 : index
    %c0_43 = arith.constant 0 : index
    %99 = vector.load %arg21[%c0_42, %c0_43] : memref<8x32xf32, #tpu.memory_space<vmem>>, vector<8x8xf32>
    tpu.vector_store %arg21[%c0_42, %c0_43], %98 {strides = array<i32>} : memref<8x32xf32, #tpu.memory_space<vmem>>, vector<8x8xf32>,
    %100 = vector.extract_strided_slice %74 {offsets = [0, 8], sizes = [8, 8], strides = [1, 1]} : vector<8x32xbf16> to vector<8x8xbf16>
    %101 = vector.extract_strided_slice %75 {offsets = [0, 8], sizes = [8, 8], strides = [1, 1]} : vector<8x32xbf16> to vector<8x8xbf16>
    %cst_44 = arith.constant dense<0.000000e+00> : vector<8x8xf32>
    %102 = tpu.matmul %100, %101, %cst_44 {dimension_numbers = #tpu.dot_dimension_numbers<[1], [1], [0], [0], [0, 0, 1, 0], [], []>} : vector<8x8xbf16>, vector<8x8xbf16>, vector<8x8xf32> -> vector<8x8xf32>
    %103 = arith.addf %102, %81 : vector<8x8xf32>
    %cst_45 = arith.constant dense<0xFF800000> : vector<8xf32>
    %104 = vector.multi_reduction <maximumf>, %103, %cst_45 [1] : vector<8x8xf32> to vector<8xf32>
    %105 = vector.shape_cast %104 : vector<8xf32> to vector<8x1xf32>
    %106 = vector.broadcast %105 : vector<8x1xf32> to vector<8x8xf32>
    %107 = arith.subf %103, %106 : vector<8x8xf32>
    %108 = math.exp %107 : vector<8x8xf32>
    %cst_46 = arith.constant dense<0.000000e+00> : vector<8xf32>
    %109 = vector.multi_reduction <add>, %108, %cst_46 [1] : vector<8x8xf32> to vector<8xf32>
    %110 = vector.shape_cast %109 : vector<8xf32> to vector<8x1xf32>
    %111 = tpu.reciprocal %110 {approx = true} : vector<8x1xf32> -> vector<8x1xf32>
    %112 = vector.broadcast %111 : vector<8x1xf32> to vector<8x8xf32>
    %113 = arith.mulf %108, %112 : vector<8x8xf32>
    %114 = arith.truncf %113 : vector<8x8xf32> to vector<8x8xbf16>
    %115 = vector.extract_strided_slice %76 {offsets = [0, 8], sizes = [8, 8], strides = [1, 1]} : vector<8x32xbf16> to vector<8x8xbf16>
    %cst_47 = arith.constant dense<0.000000e+00> : vector<8x8xf32>
    %116 = tpu.matmul %114, %115, %cst_47 {dimension_numbers = #tpu.dot_dimension_numbers<[1], [0], [0], [1], [0, 0, 1, 1], [], []>} : vector<8x8xbf16>, vector<8x8xbf16>, vector<8x8xf32> -> vector<8x8xf32>
    %c0_48 = arith.constant 0 : index
    %c8 = arith.constant 8 : index
    %117 = vector.load %arg21[%c0_48, %c8] : memref<8x32xf32, #tpu.memory_space<vmem>>, vector<8x8xf32>
    tpu.vector_store %arg21[%c0_48, %c8], %116 {strides = array<i32>} : memref<8x32xf32, #tpu.memory_space<vmem>>, vector<8x8xf32>,
    %118 = vector.extract_strided_slice %74 {offsets = [0, 16], sizes = [8, 8], strides = [1, 1]} : vector<8x32xbf16> to vector<8x8xbf16>
    %119 = vector.extract_strided_slice %75 {offsets = [0, 16], sizes = [8, 8], strides = [1, 1]} : vector<8x32xbf16> to vector<8x8xbf16>
    %cst_49 = arith.constant dense<0.000000e+00> : vector<8x8xf32>
    %120 = tpu.matmul %118, %119, %cst_49 {dimension_numbers = #tpu.dot_dimension_numbers<[1], [1], [0], [0], [0, 0, 1, 0], [], []>} : vector<8x8xbf16>, vector<8x8xbf16>, vector<8x8xf32> -> vector<8x8xf32>
    %121 = arith.addf %120, %81 : vector<8x8xf32>
    %cst_50 = arith.constant dense<0xFF800000> : vector<8xf32>
    %122 = vector.multi_reduction <maximumf>, %121, %cst_50 [1] : vector<8x8xf32> to vector<8xf32>
    %123 = vector.shape_cast %122 : vector<8xf32> to vector<8x1xf32>
    %124 = vector.broadcast %123 : vector<8x1xf32> to vector<8x8xf32>
    %125 = arith.subf %121, %124 : vector<8x8xf32>
    %126 = math.exp %125 : vector<8x8xf32>
    %cst_51 = arith.constant dense<0.000000e+00> : vector<8xf32>
    %127 = vector.multi_reduction <add>, %126, %cst_51 [1] : vector<8x8xf32> to vector<8xf32>
    %128 = vector.shape_cast %127 : vector<8xf32> to vector<8x1xf32>
    %129 = tpu.reciprocal %128 {approx = true} : vector<8x1xf32> -> vector<8x1xf32>
    %130 = vector.broadcast %129 : vector<8x1xf32> to vector<8x8xf32>
    %131 = arith.mulf %126, %130 : vector<8x8xf32>
    %132 = arith.truncf %131 : vector<8x8xf32> to vector<8x8xbf16>
    %133 = vector.extract_strided_slice %76 {offsets = [0, 16], sizes = [8, 8], strides = [1, 1]} : vector<8x32xbf16> to vector<8x8xbf16>
    %cst_52 = arith.constant dense<0.000000e+00> : vector<8x8xf32>
    %134 = tpu.matmul %132, %133, %cst_52 {dimension_numbers = #tpu.dot_dimension_numbers<[1], [0], [0], [1], [0, 0, 1, 1], [], []>} : vector<8x8xbf16>, vector<8x8xbf16>, vector<8x8xf32> -> vector<8x8xf32>
    %c0_53 = arith.constant 0 : index
    %c16 = arith.constant 16 : index
    %135 = vector.load %arg21[%c0_53, %c16] : memref<8x32xf32, #tpu.memory_space<vmem>>, vector<8x8xf32>
    tpu.vector_store %arg21[%c0_53, %c16], %134 {strides = array<i32>} : memref<8x32xf32, #tpu.memory_space<vmem>>, vector<8x8xf32>,
    %136 = vector.extract_strided_slice %74 {offsets = [0, 24], sizes = [8, 8], strides = [1, 1]} : vector<8x32xbf16> to vector<8x8xbf16>
    %137 = vector.extract_strided_slice %75 {offsets = [0, 24], sizes = [8, 8], strides = [1, 1]} : vector<8x32xbf16> to vector<8x8xbf16>
    %cst_54 = arith.constant dense<0.000000e+00> : vector<8x8xf32>
    %138 = tpu.matmul %136, %137, %cst_54 {dimension_numbers = #tpu.dot_dimension_numbers<[1], [1], [0], [0], [0, 0, 1, 0], [], []>} : vector<8x8xbf16>, vector<8x8xbf16>, vector<8x8xf32> -> vector<8x8xf32>
    %139 = arith.addf %138, %81 : vector<8x8xf32>
    %cst_55 = arith.constant dense<0xFF800000> : vector<8xf32>
    %140 = vector.multi_reduction <maximumf>, %139, %cst_55 [1] : vector<8x8xf32> to vector<8xf32>
    %141 = vector.shape_cast %140 : vector<8xf32> to vector<8x1xf32>
    %142 = vector.broadcast %141 : vector<8x1xf32> to vector<8x8xf32>
    %143 = arith.subf %139, %142 : vector<8x8xf32>
    %144 = math.exp %143 : vector<8x8xf32>
    %cst_56 = arith.constant dense<0.000000e+00> : vector<8xf32>
    %145 = vector.multi_reduction <add>, %144, %cst_56 [1] : vector<8x8xf32> to vector<8xf32>
    %146 = vector.shape_cast %145 : vector<8xf32> to vector<8x1xf32>
    %147 = tpu.reciprocal %146 {approx = true} : vector<8x1xf32> -> vector<8x1xf32>
    %148 = vector.broadcast %147 : vector<8x1xf32> to vector<8x8xf32>
    %149 = arith.mulf %144, %148 : vector<8x8xf32>
    %150 = arith.truncf %149 : vector<8x8xf32> to vector<8x8xbf16>
    %151 = vector.extract_strided_slice %76 {offsets = [0, 24], sizes = [8, 8], strides = [1, 1]} : vector<8x32xbf16> to vector<8x8xbf16>
    %cst_57 = arith.constant dense<0.000000e+00> : vector<8x8xf32>
    %152 = tpu.matmul %150, %151, %cst_57 {dimension_numbers = #tpu.dot_dimension_numbers<[1], [0], [0], [1], [0, 0, 1, 1], [], []>} : vector<8x8xbf16>, vector<8x8xbf16>, vector<8x8xf32> -> vector<8x8xf32>
    %c0_58 = arith.constant 0 : index
    %c24 = arith.constant 24 : index
    %153 = vector.load %arg21[%c0_58, %c24] : memref<8x32xf32, #tpu.memory_space<vmem>>, vector<8x8xf32>
    tpu.vector_store %arg21[%c0_58, %c24], %152 {strides = array<i32>} : memref<8x32xf32, #tpu.memory_space<vmem>>, vector<8x8xf32>,
    %c0_59 = arith.constant 0 : index
    %c0_60 = arith.constant 0 : index
    %154 = vector.load %arg21[%c0_59, %c0_60] : memref<8x32xf32, #tpu.memory_space<vmem>>, vector<8x32xf32>
    %155 = arith.truncf %154 : vector<8x32xf32> to vector<8x32xbf16>
    %c0_61 = arith.constant 0 : index
    %c0_62 = arith.constant 0 : index
    %156 = vector.load %arg10[%c0_61, %c0_62] : memref<32x32xbf16, #tpu.memory_space<vmem>>, vector<32x32xbf16>
    %cst_63 = arith.constant dense<0.000000e+00> : vector<8x32xf32>
    %157 = tpu.matmul %155, %156, %cst_63 {dimension_numbers = #tpu.dot_dimension_numbers<[1], [0], [0], [1], [0, 0, 1, 1], [], []>} : vector<8x32xbf16>, vector<32x32xbf16>, vector<8x32xf32> -> vector<8x32xf32>
    %c0_64 = arith.constant 0 : index
    %c0_65 = arith.constant 0 : index
    %158 = vector.load %arg11[%c0_64, %c0_65] : memref<1x32xf32, #tpu.memory_space<vmem>>, vector<1x32xf32>
    %159 = vector.broadcast %158 : vector<1x32xf32> to vector<8x32xf32>
    %160 = arith.addf %157, %159 : vector<8x32xf32>
    %161 = arith.addf %6, %160 : vector<8x32xf32>
    %c0_66 = arith.constant 0 : index
    %c0_67 = arith.constant 0 : index
    %162 = vector.load %arg18[%c0_66, %c0_67] : memref<1x32xf32, #tpu.memory_space<vmem>>, vector<1x32xf32>
    %c0_68 = arith.constant 0 : index
    %c0_69 = arith.constant 0 : index
    %163 = vector.load %arg19[%c0_68, %c0_69] : memref<1x32xf32, #tpu.memory_space<vmem>>, vector<1x32xf32>
    %cst_70 = arith.constant dense<0.000000e+00> : vector<8xf32>
    %164 = vector.multi_reduction <add>, %161, %cst_70 [1] : vector<8x32xf32> to vector<8xf32>
    %165 = vector.shape_cast %164 : vector<8xf32> to vector<8x1xf32>
    %cst_71 = arith.constant 3.200000e+01 : f32
    %166 = vector.broadcast %cst_71 : f32 to vector<8x1xf32>
    %167 = arith.divf %165, %166 : vector<8x1xf32>
    %168 = vector.broadcast %167 : vector<8x1xf32> to vector<8x32xf32>
    %169 = arith.subf %161, %168 : vector<8x32xf32>
    %170 = arith.mulf %169, %169 : vector<8x32xf32>
    %cst_72 = arith.constant dense<0.000000e+00> : vector<8xf32>
    %171 = vector.multi_reduction <add>, %170, %cst_72 [1] : vector<8x32xf32> to vector<8xf32>
    %172 = vector.shape_cast %171 : vector<8xf32> to vector<8x1xf32>
    %cst_73 = arith.constant 3.200000e+01 : f32
    %173 = vector.broadcast %cst_73 : f32 to vector<8x1xf32>
    %174 = arith.divf %172, %173 : vector<8x1xf32>
    %175 = vector.broadcast %167 : vector<8x1xf32> to vector<8x32xf32>
    %176 = arith.subf %161, %175 : vector<8x32xf32>
    %cst_74 = arith.constant 9.99999997E-7 : f32
    %177 = vector.broadcast %cst_74 : f32 to vector<8x1xf32>
    %178 = arith.addf %174, %177 : vector<8x1xf32>
    %179 = math.rsqrt %178 : vector<8x1xf32>
    %180 = vector.broadcast %179 : vector<8x1xf32> to vector<8x32xf32>
    %181 = arith.mulf %176, %180 : vector<8x32xf32>
    %182 = vector.broadcast %162 : vector<1x32xf32> to vector<8x32xf32>
    %183 = arith.mulf %181, %182 : vector<8x32xf32>
    %184 = vector.broadcast %163 : vector<1x32xf32> to vector<8x32xf32>
    %185 = arith.addf %183, %184 : vector<8x32xf32>
    %186 = arith.truncf %185 : vector<8x32xf32> to vector<8x32xbf16>
    %c0_75 = arith.constant 0 : index
    %c0_76 = arith.constant 0 : index
    %187 = vector.load %arg12[%c0_75, %c0_76] : memref<32x128xbf16, #tpu.memory_space<vmem>>, vector<32x128xbf16>
    %cst_77 = arith.constant dense<0.000000e+00> : vector<8x128xf32>
    %188 = tpu.matmul %186, %187, %cst_77 {dimension_numbers = #tpu.dot_dimension_numbers<[1], [0], [0], [1], [0, 0, 1, 1], [], []>} : vector<8x32xbf16>, vector<32x128xbf16>, vector<8x128xf32> -> vector<8x128xf32>
    %c0_78 = arith.constant 0 : index
    %c0_79 = arith.constant 0 : index
    %189 = vector.load %arg13[%c0_78, %c0_79] : memref<1x128xf32, #tpu.memory_space<vmem>>, vector<1x128xf32>
    %190 = vector.broadcast %189 : vector<1x128xf32> to vector<8x128xf32>
    %191 = arith.addf %188, %190 : vector<8x128xf32>
    %cst_80 = arith.constant 0.000000e+00 : f32
    %192 = vector.broadcast %cst_80 : f32 to vector<8x128xf32>
    %193 = arith.maximumf %191, %192 : vector<8x128xf32>
    %194 = arith.truncf %193 : vector<8x128xf32> to vector<8x128xbf16>
    %c0_81 = arith.constant 0 : index
    %c0_82 = arith.constant 0 : index
    %195 = vector.load %arg14[%c0_81, %c0_82] : memref<128x32xbf16, #tpu.memory_space<vmem>>, vector<128x32xbf16>
    %cst_83 = arith.constant dense<0.000000e+00> : vector<8x32xf32>
    %196 = tpu.matmul %194, %195, %cst_83 {dimension_numbers = #tpu.dot_dimension_numbers<[1], [0], [0], [1], [0, 0, 1, 1], [], []>} : vector<8x128xbf16>, vector<128x32xbf16>, vector<8x32xf32> -> vector<8x32xf32>
    %c0_84 = arith.constant 0 : index
    %c0_85 = arith.constant 0 : index
    %197 = vector.load %arg15[%c0_84, %c0_85] : memref<1x32xf32, #tpu.memory_space<vmem>>, vector<1x32xf32>
    %198 = vector.broadcast %197 : vector<1x32xf32> to vector<8x32xf32>
    %199 = arith.addf %196, %198 : vector<8x32xf32>
    %200 = arith.addf %161, %199 : vector<8x32xf32>
    %c0_86 = arith.constant 0 : index
    %c0_87 = arith.constant 0 : index
    %c0_88 = arith.constant 0 : index
    %201 = vector.load %arg20[%c0_86, %c0_87, %c0_88] : memref<1x8x32xf32, #tpu.memory_space<vmem>>, vector<1x8x32xf32>
    %202 = vector.shape_cast %201 : vector<1x8x32xf32> to vector<8x32xf32>
    %203 = vector.shape_cast %200 : vector<8x32xf32> to vector<1x8x32xf32>
    tpu.vector_store %arg20[%c0_86, %c0_87, %c0_88], %203 {strides = array<i32>} : memref<1x8x32xf32, #tpu.memory_space<vmem>>, vector<1x8x32xf32>,
    return
  }
  func.func @transform_0(%arg0: i32, %arg1: i32) -> (i32, i32, i32) {
    %c0_i32 = arith.constant 0 : i32
    %c0_i32_0 = arith.constant 0 : i32
    %c0_i32_1 = arith.constant 0 : i32
    return %arg0, %c0_i32, %c0_i32_0 : i32, i32, i32
  }
  func.func @transform_1(%arg0: i32, %arg1: i32) -> (i32, i32, i32) {
    %c0_i32 = arith.constant 0 : i32
    %c0_i32_0 = arith.constant 0 : i32
    return %arg0, %arg1, %c0_i32 : i32, i32, i32
  }
  func.func @transform_2(%arg0: i32, %arg1: i32) -> (i32, i32) {
    %c0_i32 = arith.constant 0 : i32
    %c0_i32_0 = arith.constant 0 : i32
    %c0_i32_1 = arith.constant 0 : i32
    return %c0_i32, %c0_i32_0 : i32, i32
  }
  func.func @transform_3(%arg0: i32, %arg1: i32) -> (i32, i32) {
    %c0_i32 = arith.constant 0 : i32
    %c0_i32_0 = arith.constant 0 : i32
    %c0_i32_1 = arith.constant 0 : i32
    return %c0_i32, %c0_i32_0 : i32, i32
  }
  func.func @transform_4(%arg0: i32, %arg1: i32) -> (i32, i32) {
    %c0_i32 = arith.constant 0 : i32
    %c0_i32_0 = arith.constant 0 : i32
    %c0_i32_1 = arith.constant 0 : i32
    return %c0_i32, %c0_i32_0 : i32, i32
  }
  func.func @transform_5(%arg0: i32, %arg1: i32) -> (i32, i32) {
    %c0_i32 = arith.constant 0 : i32
    %c0_i32_0 = arith.constant 0 : i32
    %c0_i32_1 = arith.constant 0 : i32
    return %c0_i32, %c0_i32_0 : i32, i32
  }
  func.func @transform_6(%arg0: i32, %arg1: i32) -> (i32, i32) {
    %c0_i32 = arith.constant 0 : i32
    %c0_i32_0 = arith.constant 0 : i32
    %c0_i32_1 = arith.constant 0 : i32
    return %c0_i32, %c0_i32_0 : i32, i32
  }
  func.func @transform_7(%arg0: i32, %arg1: i32) -> (i32, i32) {
    %c0_i32 = arith.constant 0 : i32
    %c0_i32_0 = arith.constant 0 : i32
    %c0_i32_1 = arith.constant 0 : i32
    return %c0_i32, %c0_i32_0 : i32, i32
  }
  func.func @transform_8(%arg0: i32, %arg1: i32) -> (i32, i32) {
    %c0_i32 = arith.constant 0 : i32
    %c0_i32_0 = arith.constant 0 : i32
    %c0_i32_1 = arith.constant 0 : i32
    return %c0_i32, %c0_i32_0 : i32, i32
  }
  func.func @transform_9(%arg0: i32, %arg1: i32) -> (i32, i32) {
    %c0_i32 = arith.constant 0 : i32
    %c0_i32_0 = arith.constant 0 : i32
    %c0_i32_1 = arith.constant 0 : i32
    return %c0_i32, %c0_i32_0 : i32, i32
  }
  func.func @transform_10(%arg0: i32, %arg1: i32) -> (i32, i32) {
    %c0_i32 = arith.constant 0 : i32
    %c0_i32_0 = arith.constant 0 : i32
    %c0_i32_1 = arith.constant 0 : i32
    return %c0_i32, %c0_i32_0 : i32, i32
  }
  func.func @transform_11(%arg0: i32, %arg1: i32) -> (i32, i32) {
    %c0_i32 = arith.constant 0 : i32
    %c0_i32_0 = arith.constant 0 : i32
    %c0_i32_1 = arith.constant 0 : i32
    return %c0_i32, %c0_i32_0 : i32, i32
  }
  func.func @transform_12(%arg0: i32, %arg1: i32) -> (i32, i32) {
    %c0_i32 = arith.constant 0 : i32
    %c0_i32_0 = arith.constant 0 : i32
    %c0_i32_1 = arith.constant 0 : i32
    return %c0_i32, %c0_i32_0 : i32, i32
  }
  func.func @transform_13(%arg0: i32, %arg1: i32) -> (i32, i32) {
    %c0_i32 = arith.constant 0 : i32
    %c0_i32_0 = arith.constant 0 : i32
    %c0_i32_1 = arith.constant 0 : i32
    return %c0_i32, %c0_i32_0 : i32, i32
  }
  func.func @transform_14(%arg0: i32, %arg1: i32) -> (i32, i32) {
    %c0_i32 = arith.constant 0 : i32
    %c0_i32_0 = arith.constant 0 : i32
    %c0_i32_1 = arith.constant 0 : i32
    return %c0_i32, %c0_i32_0 : i32, i32
  }
  func.func @transform_15(%arg0: i32, %arg1: i32) -> (i32, i32) {
    %c0_i32 = arith.constant 0 : i32
    %c0_i32_0 = arith.constant 0 : i32
    %c0_i32_1 = arith.constant 0 : i32
    return %c0_i32, %c0_i32_0 : i32, i32
  }
  func.func @transform_16(%arg0: i32, %arg1: i32) -> (i32, i32) {
    %c0_i32 = arith.constant 0 : i32
    %c0_i32_0 = arith.constant 0 : i32
    %c0_i32_1 = arith.constant 0 : i32
    return %c0_i32, %c0_i32_0 : i32, i32
  }
  func.func @transform_17(%arg0: i32, %arg1: i32) -> (i32, i32) {
    %c0_i32 = arith.constant 0 : i32
    %c0_i32_0 = arith.constant 0 : i32
    %c0_i32_1 = arith.constant 0 : i32
    return %c0_i32, %c0_i32_0 : i32, i32
  }
  func.func @transform_18(%arg0: i32, %arg1: i32) -> (i32, i32, i32) {
    %c0_i32 = arith.constant 0 : i32
    %c0_i32_0 = arith.constant 0 : i32
    return %arg0, %arg1, %c0_i32 : i32, i32, i32
  }
}

</mosaic_0001>

<llo_original>
// kernel: tpu_custom_call.1
$region0: #{tpu_custom_call.1}
  #allocation0 [shape = 'u32[]', space=smem, size = 0x4, offset = 0x4, fixed_abs, tag = 'smem constant byte address 0x4 - core index']
  #allocation1 [shape = 'u32[144,128]{1,0:T(1,128)}', space=vmem, size = 0x12000, scoped, tag = 'internal scratch']
  #allocation2 [shape = 'f32[8,32]{1,0:T(8,128)}', space=vmem, size = 0x1000, scoped, tag = 'scratch operand']
  %s0 = inlined_call_operand.vmem [shape: f32[2,8,32], index: 0, kind: input, shape index: {}]
  %s1 = inlined_call_operand.vmem [shape: s32[2,8,8], index: 1, kind: input, shape index: {}]
  %s2 = inlined_call_operand.vmem [shape: bf16[32,32], index: 2, kind: input, shape index: {}]
  %s3 = inlined_call_operand.vmem [shape: f32[1,32], index: 3, kind: input, shape index: {}]
  %s4 = inlined_call_operand.vmem [shape: bf16[32,32], index: 4, kind: input, shape index: {}]
  %s5 = inlined_call_operand.vmem [shape: f32[1,32], index: 5, kind: input, shape index: {}]
  %s6 = inlined_call_operand.vmem [shape: bf16[32,32], index: 6, kind: input, shape index: {}]
  %s7 = inlined_call_operand.hbm [shape: f32[1,32], index: 7, kind: input, shape index: {}]
  %s8 = inlined_call_operand.hbm [shape: bf16[32,32], index: 8, kind: input, shape index: {}]
  %s9 = inlined_call_operand.hbm [shape: f32[1,32], index: 9, kind: input, shape index: {}]
  %s10 = inlined_call_operand.vmem [shape: bf16[32,128], index: 10, kind: input, shape index: {}]
  %s11 = inlined_call_operand.vmem [shape: f32[1,128], index: 11, kind: input, shape index: {}]
  %s12 = inlined_call_operand.vmem [shape: bf16[128,32], index: 12, kind: input, shape index: {}]
  %s13 = inlined_call_operand.vmem [shape: f32[1,32], index: 13, kind: input, shape index: {}]
  %s14 = inlined_call_operand.vmem [shape: f32[1,32], index: 14, kind: input, shape index: {}]
  %s15 = inlined_call_operand.vmem [shape: f32[1,32], index: 15, kind: input, shape index: {}]
  %s16 = inlined_call_operand.vmem [shape: f32[1,32], index: 16, kind: input, shape index: {}]
  %s17 = inlined_call_operand.vmem [shape: f32[1,32], index: 17, kind: input, shape index: {}]
  %s18 = inlined_call_operand.hbm [shape: f32[2,8,32], index: 18, kind: output, shape index: {}]
  %s19 = sld [smem:[#allocation0]]
  $region117: #{tpu_custom_call.1} parent=0
    _
  %s21 = ssub.s32 1, %s19
  %s22 = scalar_select 0, %s21, %s19
  $region1: #{tpu_custom_call.1} parent=0
    #allocation3 [shape = 'u8[512]{0}', space=vmem, size = 0x400, scoped, tag = 'input window, operand 7, single buffered']
    #allocation4 [shape = 's32[2]{0}', space=sflag, size = 0x8, scoped, tag = 'scoped memory for tpu_custom_call.1']
    #allocation5 [shape = 's32[2]{0}', space=sflag, size = 0x8, scoped, tag = 'scoped memory for tpu_custom_call.1']
    #allocation6 [shape = 'u8[8192]{0}', space=vmem, size = 0x2000, scoped, tag = 'input window, operand 8, single buffered']
    #allocation7 [shape = 's32[1]{0}', space=sflag, size = 0x4, scoped, tag = 'scoped memory for tpu_custom_call.1']
    #allocation8 [shape = 'u8[512]{0}', space=vmem, size = 0x400, scoped, tag = 'input window, operand 9, single buffered']
    #allocation9 [shape = 'u8[8192]{0}', space=vmem, size = 0x2000, scoped, tag = 'output window, operand 0']
    %23 = vsyncpa [#allocation4], 0
    %24 = vsyncpa [#allocation7], 0
    %25 = vsyncpa [#allocation5], 0
    %s26 = scalar_lea.sflag [#allocation5], 1
    %27 = vsyncpa %s26, 0
    loop: start=0, step=1, limit=4
    $region2: #{tpu_custom_call.1} parent=1 // loop_pre_header
      _
    $region3: #{tpu_custom_call.1} parent=1 // loop_header
      %s29 = sphi 0, %s33
      %p30 = scmp.ge.s32.totalorder %s29, 4
      %s36 = sphi 0, %s48
      %s37 = sphi 0, %s44
      %s38 = sphi 0, %s36
      %s39 = sphi 0, %s37
      %s40 = sphi 0, %s38
      %s41 = sphi 0, %s39
      %s51 = sphi 0, %s53
      %s54 = sphi 0, %s51
      %s55 = sphi 0, %s54
      %s71 = sphi 0, %s55
      %s79 = sphi 0, %s81
      %s82 = sphi 0, %s79
      %s83 = sphi 0, %s82
      %s99 = sphi 0, %s83
      %s103 = sphi 0, %s103
      %s105 = sphi 0, %s103
      %s106 = sphi 0, %s105
      %s120 = sphi 0, %s106
      %s124 = sphi 0, %s124
      %s126 = sphi 0, %s124
      %s127 = sphi 0, %s126
      %s141 = sphi 0, %s127
      %s145 = sphi 0, %s145
      %s147 = sphi 0, %s145
      %s148 = sphi 0, %s147
      %s162 = sphi 0, %s148
      %s166 = sphi 0, %s166
      %s168 = sphi 0, %s166
      %s169 = sphi 0, %s168
      %s183 = sphi 0, %s169
      %s187 = sphi 0, %s187
      %s189 = sphi 0, %s187
      %s190 = sphi 0, %s189
      %s204 = sphi 0, %s190
      %s208 = sphi 0, %s208
      %s210 = sphi 0, %s208
      %s211 = sphi 0, %s210
      %s225 = sphi 0, %s211
      %s229 = sphi 0, %s229
      %s231 = sphi 0, %s229
      %s232 = sphi 0, %s231
      %s246 = sphi 0, %s232
      %s250 = sphi 0, %s250
      %s252 = sphi 0, %s250
      %s253 = sphi 0, %s252
      %s267 = sphi 0, %s253
      %s271 = sphi 0, %s271
      %s273 = sphi 0, %s271
      %s274 = sphi 0, %s273
      %s288 = sphi 0, %s274
      %s292 = sphi 0, %s292
      %s294 = sphi 0, %s292
      %s295 = sphi 0, %s294
      %s309 = sphi 0, %s295
      %s313 = sphi 0, %s313
      %s315 = sphi 0, %s313
      %s316 = sphi 0, %s315
      %s330 = sphi 0, %s316
      %s334 = sphi 0, %s334
      %s336 = sphi 0, %s334
      %s337 = sphi 0, %s336
      %s351 = sphi 0, %s337
      %s355 = sphi 0, %s355
      %s357 = sphi 0, %s355
      %s358 = sphi 0, %s357
      %s372 = sphi 0, %s358
      %s376 = sphi 0, %s376
      %s378 = sphi 0, %s376
      %s379 = sphi 0, %s378
      %s393 = sphi 0, %s379
      %s397 = sphi 0, %s397
      %s399 = sphi 0, %s397
      %s400 = sphi 0, %s399
      %s414 = sphi 0, %s400
      %s418 = sphi 0, %s418
      %s420 = sphi 0, %s418
      %s421 = sphi 0, %s420
      %s435 = sphi 0, %s421
      %s443 = sphi 0, %s445
      %s446 = sphi 0, %s443
      %s447 = sphi 0, %s446
      %s463 = sphi 0, %s447
    $region4: #{tpu_custom_call.1} parent=1 // loop_header_branch
      %32 = sbr.rel (%p30) target = $region8
    $region5: #{tpu_custom_call.1} parent=1 // loop_body
      %s34 = ssub.s32 %s29, 1
      %s35 = ssub.s32 %s29, 2
      %s42 = sadd.s32 1, %s37
      %p43 = scmp.ge.s32.totalorder %s42, 1
      %s44 = scalar_select %p43, 0, %s42
      %s45 = sadd.s32 1, %s36
      %s46 = scalar_select %p43, %s45, %s36
      %p47 = scmp.ge.s32.totalorder %s46, 2
      %s48 = scalar_select %p47, 0, %s46
      %s49 = ssub.s32 %s36, %s48
      %p50 = scmp.eq.s32.totalorder %s49, 0
      %s52 = sadd.s32 %s51, 1
      %s53 = scalar_select %p50, %s51, %s52
      %p56 = pneg %p50
      %p57 = scmp.eq.s32.totalorder %s29, 1
      %p58 = por %p56, %p57
      %p59 = scmp.ne.s32.totalorder %s51, %s54
      %p60 = scmp.eq.s32.totalorder %s29, 0
      %p61 = por %p59, %p60
      %p62 = scmp.ne.s32.totalorder %s51, %s54
      %p63 = scmp.eq.s32.totalorder %s34, 1
      %p64 = por %p62, %p63
      %p65 = scmp.ne.s32.totalorder %s54, %s55
      %p66 = scmp.eq.s32.totalorder %s34, 0
      %p67 = por %p65, %p66
      %p68 = scmp.ne.s32.totalorder %s54, %s55
      %p69 = scmp.eq.s32.totalorder %s35, 1
      %p70 = por %p68, %p69
      %p72 = scmp.ne.s32.totalorder %s55, %s71
      %p73 = scmp.eq.s32.totalorder %s35, 0
      %p74 = por %p72, %p73
      %s75 = ssub.s32 %s36, %s48
      %s76 = ssub.s32 %s37, %s44
      %s77 = sor.u32 %s75, %s76
      %p78 = scmp.eq.s32.totalorder %s77, 0
      %s80 = sadd.s32 %s79, 1
      %s81 = scalar_select %p78, %s79, %s80
      %p84 = pneg %p78
      %p85 = scmp.eq.s32.totalorder %s29, 1
      %p86 = por %p84, %p85
      %p87 = scmp.ne.s32.totalorder %s79, %s82
      %p88 = scmp.eq.s32.totalorder %s29, 0
      %p89 = por %p87, %p88
      %p90 = scmp.ne.s32.totalorder %s79, %s82
      %p91 = scmp.eq.s32.totalorder %s34, 1
      %p92 = por %p90, %p91
      %p93 = scmp.ne.s32.totalorder %s82, %s83
      %p94 = scmp.eq.s32.totalorder %s34, 0
      %p95 = por %p93, %p94
      %p96 = scmp.ne.s32.totalorder %s82, %s83
      %p97 = scmp.eq.s32.totalorder %s35, 1
      %p98 = por %p96, %p97
      %p100 = scmp.ne.s32.totalorder %s83, %s99
      %p101 = scmp.eq.s32.totalorder %s35, 0
      %p102 = por %p100, %p101
      %s104 = sadd.s32 %s103, 1
      %p107 = scmp.eq.s32.totalorder %s29, 1
      %p108 = scmp.ne.s32.totalorder %s103, %s105
      %p109 = scmp.eq.s32.totalorder %s29, 0
      %p110 = por %p108, %p109
      %p111 = scmp.ne.s32.totalorder %s103, %s105
      %p112 = scmp.eq.s32.totalorder %s34, 1
      %p113 = por %p111, %p112
      %p114 = scmp.ne.s32.totalorder %s105, %s106
      %p115 = scmp.eq.s32.totalorder %s34, 0
      %p116 = por %p114, %p115
      %p117 = scmp.ne.s32.totalorder %s105, %s106
      %p118 = scmp.eq.s32.totalorder %s35, 1
      %p119 = por %p117, %p118
      %p121 = scmp.ne.s32.totalorder %s106, %s120
      %p122 = scmp.eq.s32.totalorder %s35, 0
      %p123 = por %p121, %p122
      %s125 = sadd.s32 %s124, 1
      %p128 = scmp.eq.s32.totalorder %s29, 1
      %p129 = scmp.ne.s32.totalorder %s124, %s126
      %p130 = scmp.eq.s32.totalorder %s29, 0
      %p131 = por %p129, %p130
      %p132 = scmp.ne.s32.totalorder %s124, %s126
      %p133 = scmp.eq.s32.totalorder %s34, 1
      %p134 = por %p132, %p133
      %p135 = scmp.ne.s32.totalorder %s126, %s127
      %p136 = scmp.eq.s32.totalorder %s34, 0
      %p137 = por %p135, %p136
      %p138 = scmp.ne.s32.totalorder %s126, %s127
      %p139 = scmp.eq.s32.totalorder %s35, 1
      %p140 = por %p138, %p139
      %p142 = scmp.ne.s32.totalorder %s127, %s141
      %p143 = scmp.eq.s32.totalorder %s35, 0
      %p144 = por %p142, %p143
      %s146 = sadd.s32 %s145, 1
      %p149 = scmp.eq.s32.totalorder %s29, 1
      %p150 = scmp.ne.s32.totalorder %s145, %s147
      %p151 = scmp.eq.s32.totalorder %s29, 0
      %p152 = por %p150, %p151
      %p153 = scmp.ne.s32.totalorder %s145, %s147
      %p154 = scmp.eq.s32.totalorder %s34, 1
      %p155 = por %p153, %p154
      %p156 = scmp.ne.s32.totalorder %s147, %s148
      %p157 = scmp.eq.s32.totalorder %s34, 0
      %p158 = por %p156, %p157
      %p159 = scmp.ne.s32.totalorder %s147, %s148
      %p160 = scmp.eq.s32.totalorder %s35, 1
      %p161 = por %p159, %p160
      %p163 = scmp.ne.s32.totalorder %s148, %s162
      %p164 = scmp.eq.s32.totalorder %s35, 0
      %p165 = por %p163, %p164
      %s167 = sadd.s32 %s166, 1
      %p170 = scmp.eq.s32.totalorder %s29, 1
      %p171 = scmp.ne.s32.totalorder %s166, %s168
      %p172 = scmp.eq.s32.totalorder %s29, 0
      %p173 = por %p171, %p172
      %p174 = scmp.ne.s32.totalorder %s166, %s168
      %p175 = scmp.eq.s32.totalorder %s34, 1
      %p176 = por %p174, %p175
      %p177 = scmp.ne.s32.totalorder %s168, %s169
      %p178 = scmp.eq.s32.totalorder %s34, 0
      %p179 = por %p177, %p178
      %p180 = scmp.ne.s32.totalorder %s168, %s169
      %p181 = scmp.eq.s32.totalorder %s35, 1
      %p182 = por %p180, %p181
      %p184 = scmp.ne.s32.totalorder %s169, %s183
      %p185 = scmp.eq.s32.totalorder %s35, 0
      %p186 = por %p184, %p185
      %s188 = sadd.s32 %s187, 1
      %p191 = scmp.eq.s32.totalorder %s29, 1
      %p192 = scmp.ne.s32.totalorder %s187, %s189
      %p193 = scmp.eq.s32.totalorder %s29, 0
      %p194 = por %p192, %p193
      %p195 = scmp.ne.s32.totalorder %s187, %s189
      %p196 = scmp.eq.s32.totalorder %s34, 1
      %p197 = por %p195, %p196
      %p198 = scmp.ne.s32.totalorder %s189, %s190
      %p199 = scmp.eq.s32.totalorder %s34, 0
      %p200 = por %p198, %p199
      %p201 = scmp.ne.s32.totalorder %s189, %s190
      %p202 = scmp.eq.s32.totalorder %s35, 1
      %p203 = por %p201, %p202
      %p205 = scmp.ne.s32.totalorder %s190, %s204
      %p206 = scmp.eq.s32.totalorder %s35, 0
      %p207 = por %p205, %p206
      %s209 = sadd.s32 %s208, 1
      %p212 = scmp.eq.s32.totalorder %s29, 1
      %p213 = scmp.ne.s32.totalorder %s208, %s210
      %p214 = scmp.eq.s32.totalorder %s29, 0
      %p215 = por %p213, %p214
      %p216 = scmp.ne.s32.totalorder %s208, %s210
      %p217 = scmp.eq.s32.totalorder %s34, 1
      %p218 = por %p216, %p217
      %p219 = scmp.ne.s32.totalorder %s210, %s211
      %p220 = scmp.eq.s32.totalorder %s34, 0
      %p221 = por %p219, %p220
      %p222 = scmp.ne.s32.totalorder %s210, %s211
      %p223 = scmp.eq.s32.totalorder %s35, 1
      %p224 = por %p222, %p223
      %p226 = scmp.ne.s32.totalorder %s211, %s225
      %p227 = scmp.eq.s32.totalorder %s35, 0
      %p228 = por %p226, %p227
      %s230 = sadd.s32 %s229, 1
      %p233 = scmp.eq.s32.totalorder %s29, 1
      %p234 = scmp.ne.s32.totalorder %s229, %s231
      %p235 = scmp.eq.s32.totalorder %s29, 0
      %p236 = por %p234, %p235
      %p237 = scmp.ne.s32.totalorder %s229, %s231
      %p238 = scmp.eq.s32.totalorder %s34, 1
      %p239 = por %p237, %p238
      %p240 = scmp.ne.s32.totalorder %s231, %s232
      %p241 = scmp.eq.s32.totalorder %s34, 0
      %p242 = por %p240, %p241
      %p243 = scmp.ne.s32.totalorder %s231, %s232
      %p244 = scmp.eq.s32.totalorder %s35, 1
      %p245 = por %p243, %p244
      %p247 = scmp.ne.s32.totalorder %s232, %s246
      %p248 = scmp.eq.s32.totalorder %s35, 0
      %p249 = por %p247, %p248
      %s251 = sadd.s32 %s250, 1
      %p254 = scmp.eq.s32.totalorder %s29, 1
      %p255 = scmp.ne.s32.totalorder %s250, %s252
      %p256 = scmp.eq.s32.totalorder %s29, 0
      %p257 = por %p255, %p256
      %p258 = scmp.ne.s32.totalorder %s250, %s252
      %p259 = scmp.eq.s32.totalorder %s34, 1
      %p260 = por %p258, %p259
      %p261 = scmp.ne.s32.totalorder %s252, %s253
      %p262 = scmp.eq.s32.totalorder %s34, 0
      %p263 = por %p261, %p262
      %p264 = scmp.ne.s32.totalorder %s252, %s253
      %p265 = scmp.eq.s32.totalorder %s35, 1
      %p266 = por %p264, %p265
      %p268 = scmp.ne.s32.totalorder %s253, %s267
      %p269 = scmp.eq.s32.totalorder %s35, 0
      %p270 = por %p268, %p269
      %s272 = sadd.s32 %s271, 1
      %p275 = scmp.eq.s32.totalorder %s29, 1
      %p276 = scmp.ne.s32.totalorder %s271, %s273
      %p277 = scmp.eq.s32.totalorder %s29, 0
      %p278 = por %p276, %p277
      %p279 = scmp.ne.s32.totalorder %s271, %s273
      %p280 = scmp.eq.s32.totalorder %s34, 1
      %p281 = por %p279, %p280
      %p282 = scmp.ne.s32.totalorder %s273, %s274
      %p283 = scmp.eq.s32.totalorder %s34, 0
      %p284 = por %p282, %p283
      %p285 = scmp.ne.s32.totalorder %s273, %s274
      %p286 = scmp.eq.s32.totalorder %s35, 1
      %p287 = por %p285, %p286
      %p289 = scmp.ne.s32.totalorder %s274, %s288
      %p290 = scmp.eq.s32.totalorder %s35, 0
      %p291 = por %p289, %p290
      %s293 = sadd.s32 %s292, 1
      %p296 = scmp.eq.s32.totalorder %s29, 1
      %p297 = scmp.ne.s32.totalorder %s292, %s294
      %p298 = scmp.eq.s32.totalorder %s29, 0
      %p299 = por %p297, %p298
      %p300 = scmp.ne.s32.totalorder %s292, %s294
      %p301 = scmp.eq.s32.totalorder %s34, 1
      %p302 = por %p300, %p301
      %p303 = scmp.ne.s32.totalorder %s294, %s295
      %p304 = scmp.eq.s32.totalorder %s34, 0
      %p305 = por %p303, %p304
      %p306 = scmp.ne.s32.totalorder %s294, %s295
      %p307 = scmp.eq.s32.totalorder %s35, 1
      %p308 = por %p306, %p307
      %p310 = scmp.ne.s32.totalorder %s295, %s309
      %p311 = scmp.eq.s32.totalorder %s35, 0
      %p312 = por %p310, %p311
      %s314 = sadd.s32 %s313, 1
      %p317 = scmp.eq.s32.totalorder %s29, 1
      %p318 = scmp.ne.s32.totalorder %s313, %s315
      %p319 = scmp.eq.s32.totalorder %s29, 0
      %p320 = por %p318, %p319
      %p321 = scmp.ne.s32.totalorder %s313, %s315
      %p322 = scmp.eq.s32.totalorder %s34, 1
      %p323 = por %p321, %p322
      %p324 = scmp.ne.s32.totalorder %s315, %s316
      %p325 = scmp.eq.s32.totalorder %s34, 0
      %p326 = por %p324, %p325
      %p327 = scmp.ne.s32.totalorder %s315, %s316
      %p328 = scmp.eq.s32.totalorder %s35, 1
      %p329 = por %p327, %p328
      %p331 = scmp.ne.s32.totalorder %s316, %s330
      %p332 = scmp.eq.s32.totalorder %s35, 0
      %p333 = por %p331, %p332
      %s335 = sadd.s32 %s334, 1
      %p338 = scmp.eq.s32.totalorder %s29, 1
      %p339 = scmp.ne.s32.totalorder %s334, %s336
      %p340 = scmp.eq.s32.totalorder %s29, 0
      %p341 = por %p339, %p340
      %p342 = scmp.ne.s32.totalorder %s334, %s336
      %p343 = scmp.eq.s32.totalorder %s34, 1
      %p344 = por %p342, %p343
      %p345 = scmp.ne.s32.totalorder %s336, %s337
      %p346 = scmp.eq.s32.totalorder %s34, 0
      %p347 = por %p345, %p346
      %p348 = scmp.ne.s32.totalorder %s336, %s337
      %p349 = scmp.eq.s32.totalorder %s35, 1
      %p350 = por %p348, %p349
      %p352 = scmp.ne.s32.totalorder %s337, %s351
      %p353 = scmp.eq.s32.totalorder %s35, 0
      %p354 = por %p352, %p353
      %s356 = sadd.s32 %s355, 1
      %p359 = scmp.eq.s32.totalorder %s29, 1
      %p360 = scmp.ne.s32.totalorder %s355, %s357
      %p361 = scmp.eq.s32.totalorder %s29, 0
      %p362 = por %p360, %p361
      %p363 = scmp.ne.s32.totalorder %s355, %s357
      %p364 = scmp.eq.s32.totalorder %s34, 1
      %p365 = por %p363, %p364
      %p366 = scmp.ne.s32.totalorder %s357, %s358
      %p367 = scmp.eq.s32.totalorder %s34, 0
      %p368 = por %p366, %p367
      %p369 = scmp.ne.s32.totalorder %s357, %s358
      %p370 = scmp.eq.s32.totalorder %s35, 1
      %p371 = por %p369, %p370
      %p373 = scmp.ne.s32.totalorder %s358, %s372
      %p374 = scmp.eq.s32.totalorder %s35, 0
      %p375 = por %p373, %p374
      %s377 = sadd.s32 %s376, 1
      %p380 = scmp.eq.s32.totalorder %s29, 1
      %p381 = scmp.ne.s32.totalorder %s376, %s378
      %p382 = scmp.eq.s32.totalorder %s29, 0
      %p383 = por %p381, %p382
      %p384 = scmp.ne.s32.totalorder %s376, %s378
      %p385 = scmp.eq.s32.totalorder %s34, 1
      %p386 = por %p384, %p385
      %p387 = scmp.ne.s32.totalorder %s378, %s379
      %p388 = scmp.eq.s32.totalorder %s34, 0
      %p389 = por %p387, %p388
      %p390 = scmp.ne.s32.totalorder %s378, %s379
      %p391 = scmp.eq.s32.totalorder %s35, 1
      %p392 = por %p390, %p391
      %p394 = scmp.ne.s32.totalorder %s379, %s393
      %p395 = scmp.eq.s32.totalorder %s35, 0
      %p396 = por %p394, %p395
      %s398 = sadd.s32 %s397, 1
      %p401 = scmp.eq.s32.totalorder %s29, 1
      %p402 = scmp.ne.s32.totalorder %s397, %s399
      %p403 = scmp.eq.s32.totalorder %s29, 0
      %p404 = por %p402, %p403
      %p405 = scmp.ne.s32.totalorder %s397, %s399
      %p406 = scmp.eq.s32.totalorder %s34, 1
      %p407 = por %p405, %p406
      %p408 = scmp.ne.s32.totalorder %s399, %s400
      %p409 = scmp.eq.s32.totalorder %s34, 0
      %p410 = por %p408, %p409
      %p411 = scmp.ne.s32.totalorder %s399, %s400
      %p412 = scmp.eq.s32.totalorder %s35, 1
      %p413 = por %p411, %p412
      %p415 = scmp.ne.s32.totalorder %s400, %s414
      %p416 = scmp.eq.s32.totalorder %s35, 0
      %p417 = por %p415, %p416
      %s419 = sadd.s32 %s418, 1
      %p422 = scmp.eq.s32.totalorder %s29, 1
      %p423 = scmp.ne.s32.totalorder %s418, %s420
      %p424 = scmp.eq.s32.totalorder %s29, 0
      %p425 = por %p423, %p424
      %p426 = scmp.ne.s32.totalorder %s418, %s420
      %p427 = scmp.eq.s32.totalorder %s34, 1
      %p428 = por %p426, %p427
      %p429 = scmp.ne.s32.totalorder %s420, %s421
      %p430 = scmp.eq.s32.totalorder %s34, 0
      %p431 = por %p429, %p430
      %p432 = scmp.ne.s32.totalorder %s420, %s421
      %p433 = scmp.eq.s32.totalorder %s35, 1
      %p434 = por %p432, %p433
      %p436 = scmp.ne.s32.totalorder %s421, %s435
      %p437 = scmp.eq.s32.totalorder %s35, 0
      %p438 = por %p436, %p437
      %s439 = ssub.s32 %s36, %s48
      %s440 = ssub.s32 %s37, %s44
      %s441 = sor.u32 %s439, %s440
      %p442 = scmp.eq.s32.totalorder %s441, 0
      %s444 = sadd.s32 %s443, 1
      %s445 = scalar_select %p442, %s443, %s444
      %p448 = pneg %p442
      %p449 = scmp.eq.s32.totalorder %s29, 1
      %p450 = por %p448, %p449
      %p451 = scmp.ne.s32.totalorder %s443, %s446
      %p452 = scmp.eq.s32.totalorder %s29, 0
      %p453 = por %p451, %p452
      %p454 = scmp.ne.s32.totalorder %s443, %s446
      %p455 = scmp.eq.s32.totalorder %s34, 1
      %p456 = por %p454, %p455
      %p457 = scmp.ne.s32.totalorder %s446, %s447
      %p458 = scmp.eq.s32.totalorder %s34, 0
      %p459 = por %p457, %p458
      %p460 = scmp.ne.s32.totalorder %s446, %s447
      %p461 = scmp.eq.s32.totalorder %s35, 1
      %p462 = por %p460, %p461
      %p464 = scmp.ne.s32.totalorder %s447, %s463
      %p465 = scmp.eq.s32.totalorder %s35, 0
      %p466 = por %p464, %p465
      %p467 = scmp.le.s32.totalorder 1, %s29
      %p468 = scmp.lt.s32.totalorder %s29, 3
      %p469 = pnand %p467, %p468
      %p470 = pneg %p469
      // Predicated region
      $region9: #{tpu_custom_call.1} parent=5 // pred_check
        _
      $region10: #{tpu_custom_call.1} parent=5 // pred_check_branch
        %472 = sbr.rel (%p469) target = $region12
      $region11: #{tpu_custom_call.1} parent=5 // pred_region
        %s473 = ssub.s32 %s29, 1
        // Predicated region
        $region13: #{tpu_custom_call.1} parent=11 // pred_check
          %p474 = pneg %p116
        $region14: #{tpu_custom_call.1} parent=11 // pred_check_branch
          %476 = sbr.rel (%p474) target = $region16
        $region15: #{tpu_custom_call.1} parent=11 // pred_region
          _
        $region16: #{tpu_custom_call.1} parent=11 // pred_fallthru
          _
        // Predicated region
        $region17: #{tpu_custom_call.1} parent=11 // pred_check
          %p477 = pneg %p137
        $region18: #{tpu_custom_call.1} parent=11 // pred_check_branch
          %479 = sbr.rel (%p477) target = $region20
        $region19: #{tpu_custom_call.1} parent=11 // pred_region
          _
        $region20: #{tpu_custom_call.1} parent=11 // pred_fallthru
          _
        // Predicated region
        $region21: #{tpu_custom_call.1} parent=11 // pred_check
          %p480 = pneg %p158
        $region22: #{tpu_custom_call.1} parent=11 // pred_check_branch
          %482 = sbr.rel (%p480) target = $region24
        $region23: #{tpu_custom_call.1} parent=11 // pred_region
          _
        $region24: #{tpu_custom_call.1} parent=11 // pred_fallthru
          _
        // Predicated region
        $region25: #{tpu_custom_call.1} parent=11 // pred_check
          %p483 = pneg %p179
        $region26: #{tpu_custom_call.1} parent=11 // pred_check_branch
          %485 = sbr.rel (%p483) target = $region28
        $region27: #{tpu_custom_call.1} parent=11 // pred_region
          _
        $region28: #{tpu_custom_call.1} parent=11 // pred_fallthru
          _
        // Predicated region
        $region29: #{tpu_custom_call.1} parent=11 // pred_check
          %p486 = pneg %p200
        $region30: #{tpu_custom_call.1} parent=11 // pred_check_branch
          %488 = sbr.rel (%p486) target = $region32
        $region31: #{tpu_custom_call.1} parent=11 // pred_region
          _
        $region32: #{tpu_custom_call.1} parent=11 // pred_fallthru
          _
        // Predicated region
        $region33: #{tpu_custom_call.1} parent=11 // pred_check
          %p489 = pneg %p221
        $region34: #{tpu_custom_call.1} parent=11 // pred_check_branch
          %491 = sbr.rel (%p489) target = $region36
        $region35: #{tpu_custom_call.1} parent=11 // pred_region
          %s493 = ssub.s32 16, 16
          %494 = vsyncadd [#allocation4], %s493
          %s496 = sshll.u32 [#allocation3], 4
          %s497 = int_to_ptr.vmem [resolvable:$true] %s496
          %499 = dma.hbm_to_vmem [thread:$0]  %s7, 16, %s497, [#allocation4]
        $region36: #{tpu_custom_call.1} parent=11 // pred_fallthru
          _
        // Predicated region
        $region37: #{tpu_custom_call.1} parent=11 // pred_check
          %p500 = pneg %p242
        $region38: #{tpu_custom_call.1} parent=11 // pred_check_branch
          %502 = sbr.rel (%p500) target = $region40
        $region39: #{tpu_custom_call.1} parent=11 // pred_region
          %s504 = ssub.s32 256, 256
          %505 = vsyncadd [#allocation7], %s504
          %s506 = sshll.u32 [#allocation6], 4
          %s507 = int_to_ptr.vmem [resolvable:$true] %s506
          %512 = dma.hbm_to_vmem [thread:$0]  %s8, 256, %s507, [#allocation7], 64, 64, 4
        $region40: #{tpu_custom_call.1} parent=11 // pred_fallthru
          _
        // Predicated region
        $region41: #{tpu_custom_call.1} parent=11 // pred_check
          %p513 = pneg %p263
        $region42: #{tpu_custom_call.1} parent=11 // pred_check_branch
          %515 = sbr.rel (%p513) target = $region44
        $region43: #{tpu_custom_call.1} parent=11 // pred_region
          %s517 = ssub.s32 16, 16
          %518 = vsyncadd [#allocation7], %s517
          %s520 = sshll.u32 [#allocation8], 4
          %s521 = int_to_ptr.vmem [resolvable:$true] %s520
          %523 = dma.hbm_to_vmem [thread:$0]  %s9, 16, %s521, [#allocation7]
        $region44: #{tpu_custom_call.1} parent=11 // pred_fallthru
          _
        // Predicated region
        $region45: #{tpu_custom_call.1} parent=11 // pred_check
          %p524 = pneg %p284
        $region46: #{tpu_custom_call.1} parent=11 // pred_check_branch
          %526 = sbr.rel (%p524) target = $region48
        $region47: #{tpu_custom_call.1} parent=11 // pred_region
          _
        $region48: #{tpu_custom_call.1} parent=11 // pred_fallthru
          _
        // Predicated region
        $region49: #{tpu_custom_call.1} parent=11 // pred_check
          %p527 = pneg %p305
        $region50: #{tpu_custom_call.1} parent=11 // pred_check_branch
          %529 = sbr.rel (%p527) target = $region52
        $region51: #{tpu_custom_call.1} parent=11 // pred_region
          _
        $region52: #{tpu_custom_call.1} parent=11 // pred_fallthru
          _
        // Predicated region
        $region53: #{tpu_custom_call.1} parent=11 // pred_check
          %p530 = pneg %p326
        $region54: #{tpu_custom_call.1} parent=11 // pred_check_branch
          %532 = sbr.rel (%p530) target = $region56
        $region55: #{tpu_custom_call.1} parent=11 // pred_region
          _
        $region56: #{tpu_custom_call.1} parent=11 // pred_fallthru
          _
        // Predicated region
        $region57: #{tpu_custom_call.1} parent=11 // pred_check
          %p533 = pneg %p347
        $region58: #{tpu_custom_call.1} parent=11 // pred_check_branch
          %535 = sbr.rel (%p533) target = $region60
        $region59: #{tpu_custom_call.1} parent=11 // pred_region
          _
        $region60: #{tpu_custom_call.1} parent=11 // pred_fallthru
          _
        // Predicated region
        $region61: #{tpu_custom_call.1} parent=11 // pred_check
          %p536 = pneg %p368
        $region62: #{tpu_custom_call.1} parent=11 // pred_check_branch
          %538 = sbr.rel (%p536) target = $region64
        $region63: #{tpu_custom_call.1} parent=11 // pred_region
          _
        $region64: #{tpu_custom_call.1} parent=11 // pred_fallthru
          _
        // Predicated region
        $region65: #{tpu_custom_call.1} parent=11 // pred_check
          %p539 = pneg %p389
        $region66: #{tpu_custom_call.1} parent=11 // pred_check_branch
          %541 = sbr.rel (%p539) target = $region68
        $region67: #{tpu_custom_call.1} parent=11 // pred_region
          _
        $region68: #{tpu_custom_call.1} parent=11 // pred_fallthru
          _
        // Predicated region
        $region69: #{tpu_custom_call.1} parent=11 // pred_check
          %p542 = pneg %p410
        $region70: #{tpu_custom_call.1} parent=11 // pred_check_branch
          %544 = sbr.rel (%p542) target = $region72
        $region71: #{tpu_custom_call.1} parent=11 // pred_region
          _
        $region72: #{tpu_custom_call.1} parent=11 // pred_fallthru
          _
        // Predicated region
        $region73: #{tpu_custom_call.1} parent=11 // pred_check
          %p545 = pneg %p431
        $region74: #{tpu_custom_call.1} parent=11 // pred_check_branch
          %547 = sbr.rel (%p545) target = $region76
        $region75: #{tpu_custom_call.1} parent=11 // pred_region
          _
        $region76: #{tpu_custom_call.1} parent=11 // pred_fallthru
          _
      $region12: #{tpu_custom_call.1} parent=5 // pred_fallthru
        _
      %p548 = scmp.lt.s32.totalorder %s29, 2
      // Predicated region
      $region77: #{tpu_custom_call.1} parent=5 // pred_check
        %p549 = pneg %p548
      $region78: #{tpu_custom_call.1} parent=5 // pred_check_branch
        %551 = sbr.rel (%p549) target = $region80
      $region79: #{tpu_custom_call.1} parent=5 // pred_region
        // Predicated region
        $region81: #{tpu_custom_call.1} parent=79 // pred_check
          %p552 = pneg %p61
        $region82: #{tpu_custom_call.1} parent=79 // pred_check_branch
          %554 = sbr.rel (%p552) target = $region84
        $region83: #{tpu_custom_call.1} parent=79 // pred_region
          %p555 = scmp.lt.s32.totalorder %s36, 1
          %s556 = scalar_select %p555, %s36, 1
          %s557 = smul.addr %s556, 8
          %s558 = scalar_lea.vmem %s0, %s557
        $region84: #{tpu_custom_call.1} parent=79 // pred_fallthru
          _
        // Predicated region
        $region85: #{tpu_custom_call.1} parent=79 // pred_check
          %p559 = pneg %p89
        $region86: #{tpu_custom_call.1} parent=79 // pred_check_branch
          %561 = sbr.rel (%p559) target = $region88
        $region87: #{tpu_custom_call.1} parent=79 // pred_region
          %p562 = scmp.lt.s32.totalorder %s36, 1
          %s563 = scalar_select %p562, %s36, 1
          %p564 = scmp.lt.s32.totalorder %s37, 0
          %s565 = scalar_select %p564, %s37, 0
          %s566 = sadd.s32 %s565, %s563
          %s567 = smul.addr %s566, 8
          %s568 = scalar_lea.vmem %s1, %s567
        $region88: #{tpu_custom_call.1} parent=79 // pred_fallthru
          _
      $region80: #{tpu_custom_call.1} parent=5 // pred_fallthru
        _
      %p569 = scmp.le.s32.totalorder 1, %s29
      %p570 = scmp.lt.s32.totalorder %s29, 3
      %p571 = pnand %p569, %p570
      %p572 = pneg %p571
      // Predicated region
      $region89: #{tpu_custom_call.1} parent=5 // pred_check
        _
      $region90: #{tpu_custom_call.1} parent=5 // pred_check_branch
        %574 = sbr.rel (%p571) target = $region92
      $region91: #{tpu_custom_call.1} parent=5 // pred_region
        %s575 = ssub.s32 %s29, 1
        // Predicated region
        $region93: #{tpu_custom_call.1} parent=91 // pred_check
          %p576 = pneg %p221
        $region94: #{tpu_custom_call.1} parent=91 // pred_check_branch
          %578 = sbr.rel (%p576) target = $region96
        $region95: #{tpu_custom_call.1} parent=91 // pred_region
          %579 = dma.done [#allocation4], 16
        $region96: #{tpu_custom_call.1} parent=91 // pred_fallthru
          _
        // Predicated region
        $region97: #{tpu_custom_call.1} parent=91 // pred_check
          %p580 = pneg %p242
        $region98: #{tpu_custom_call.1} parent=91 // pred_check_branch
          %582 = sbr.rel (%p580) target = $region100
        $region99: #{tpu_custom_call.1} parent=91 // pred_region
          %583 = dma.done [#allocation7], 256
        $region100: #{tpu_custom_call.1} parent=91 // pred_fallthru
          _
        // Predicated region
        $region101: #{tpu_custom_call.1} parent=91 // pred_check
          %p584 = pneg %p263
        $region102: #{tpu_custom_call.1} parent=91 // pred_check_branch
          %586 = sbr.rel (%p584) target = $region104
        $region103: #{tpu_custom_call.1} parent=91 // pred_region
          %587 = dma.done [#allocation7], 16
        $region104: #{tpu_custom_call.1} parent=91 // pred_fallthru
          _
        %p588 = scmp.lt.s32.totalorder %s38, 1
        %s589 = scalar_select %p588, %s38, 1
        %s590 = smul.addr %s589, 8
        %s591 = scalar_lea.vmem %s0, %s590
        %p592 = pneg %p67
        %p593 = pneg %p64
        %p594 = scmp.lt.s32.totalorder %s38, 1
        %s595 = scalar_select %p594, %s38, 1
        %p596 = scmp.lt.s32.totalorder %s39, 0
        %s597 = scalar_select %p596, %s39, 0
        %s598 = sadd.s32 %s597, %s595
        %s599 = smul.addr %s598, 8
        %s600 = scalar_lea.vmem %s1, %s599
        %p601 = pneg %p95
        %p602 = pneg %p92
        %p603 = pneg %p116
        %p604 = pneg %p113
        %p605 = pneg %p137
        %p606 = pneg %p134
        %p607 = pneg %p158
        %p608 = pneg %p155
        %p609 = pneg %p179
        %p610 = pneg %p176
        %p611 = pneg %p200
        %p612 = pneg %p197
        %p613 = pneg %p221
        %p614 = pneg %p218
        %p615 = pneg %p242
        %p616 = pneg %p239
        %p617 = pneg %p263
        %p618 = pneg %p260
        %p619 = pneg %p284
        %p620 = pneg %p281
        %p621 = pneg %p305
        %p622 = pneg %p302
        %p623 = pneg %p326
        %p624 = pneg %p323
        %p625 = pneg %p347
        %p626 = pneg %p344
        %p627 = pneg %p368
        %p628 = pneg %p365
        %p629 = pneg %p389
        %p630 = pneg %p386
        %p631 = pneg %p410
        %p632 = pneg %p407
        %p633 = pneg %p431
        %p634 = pneg %p428
        %p635 = pneg %p459
        %p636 = pneg %p456
        %s637 = sand.u32 %s446, 1
        %s638 = scalar_lea.sflag [#allocation5], %s637
        %s639 = sand.u32 %s446, 1
        %s640 = smul.addr %s639, 8
        %s641 = scalar_lea.vmem [#allocation9], %s640
        %p642 = scmp.lt.s32.totalorder %s38, 1
        %s643 = scalar_select %p642, %s38, 1
        %s644 = smul.addr %s643, 8
        %s645 = scalar_lea.vmem %s0, %s644
        %p646 = scmp.lt.s32.totalorder %s38, 1
        %s647 = scalar_select %p646, %s38, 1
        %p648 = scmp.lt.s32.totalorder %s39, 0
        %s649 = scalar_select %p648, %s39, 0
        %s650 = sadd.s32 %s649, %s647
        %s651 = smul.addr %s650, 8
        %s652 = scalar_lea.vmem %s1, %s651
        %s654 = smul.u32 %s39, 8
        %v655 = vld [vmem:[%s645] sm:$0xff]
        %s656 = scalar_lea.vmem %s645, %s654
        %v657 = vld [vmem:[%s656] sm:$0xff]
        %v658 = vld [vmem:[%s652] sm:$0xff]
        %v659 = vld [vmem:[%s14] sm:$0x1]
        %v660 = vld [vmem:[%s15] sm:$0x1]
        %vm661 = vcmask 261120
        %v662 = vsel %vm661, %v655, 0.0
        %663 = vadd.xlane.f32.xlu0 %v662
        %v664 = vpop.xlane.xlu0 %663
        %v665 = vrcp.pop 32.0
        %v666 = vmul.f32 %v664, %v665
        %v667 = vsub.f32 %v655, %v666
        %v668 = vmul.f32 %v667, %v667
        %v669 = vsel %vm661, %v668, 0.0
        %670 = vadd.xlane.f32.xlu0 %v669
        %v671 = vpop.xlane.xlu0 %670
        %v672 = vmul.f32 %v671, %v665
        %v673 = vadd.f32 %v672, 1e-06
        %v674 = vrsqrt.pop %v673
        %v675 = vmul.f32 %v667, %v674
        %v677 = vlaneseq
        %v678 = vshrl.u32 %v677, 7
        %v679 = vsub.s32 0, %v678
        %v680 = vrot.slane %v659, %v679
        %v682 = vmul.f32 %v675, %v680
        %v684 = vlaneseq
        %v685 = vshrl.u32 %v684, 7
        %v686 = vsub.s32 0, %v685
        %v687 = vrot.slane %v660, %v686
        %v689 = vadd.f32 %v682, %v687
        %v690 = vpack.c.bf16 %v689, %v689
        %v691 = vsel %vm661, %v657, 0.0
        %692 = vadd.xlane.f32.xlu0 %v691
        %v693 = vpop.xlane.xlu0 %692
        %v694 = vmul.f32 %v693, %v665
        %v695 = vsub.f32 %v657, %v694
        %v696 = vmul.f32 %v695, %v695
        %v697 = vsel %vm661, %v696, 0.0
        %698 = vadd.xlane.f32.xlu0 %v697
        %v699 = vpop.xlane.xlu0 %698
        %v700 = vmul.f32 %v699, %v665
        %v701 = vadd.f32 %v700, 1e-06
        %v702 = vrsqrt.pop %v701
        %v703 = vmul.f32 %v695, %v702
        %v704 = vmul.f32 %v703, %v680
        %v705 = vadd.f32 %v704, %v687
        %v706 = vpack.c.bf16 %v705, %v705
        %v707 = vld [vmem:[%s4] sm:$0xf]
        %v708 = vld [vmem:[%s4 + $0x4] sm:$0xf]
        %v709 = vld [vmem:[%s4 + $0x8] sm:$0xf]
        %v710 = vld [vmem:[%s4 + $0xc] sm:$0xf]
        %v711 = vld [vmem:[%s5] sm:$0x1]
        %v713 = vlaneseq
        %v714 = vshrl.u32 %v713, 7
        %v715 = vsub.s32 0, %v714
        %v716 = vrot.slane %v711, %v715
        %v722 = vunpack.c.l.b16 %v707
        %v723 = vunpack.c.l.b16 %v708
        %v724 = vunpack.c.l.b16 %v709
        %v725 = vunpack.c.l.b16 %v710
        %v726 = vpack.c.b16 %v723, %v722
        %v727 = vpack.c.b16 %v725, %v724
        %v731 = vsel %vm661, %v690, 0
        %733 = vmatprep.subr.bf16.mxu0 0
        %734 = vmatpush1.bf16.msra.mxu0 %v726
        %735 = vmatprep.subr.bf16.mxu0 0
        %736 = vmatpush1.bf16.msra.mxu0 %v727
        %737 = vmatprep.subr.bf16.mxu0 0
        %738 = vmatpush1.bf16.msra.mxu0 0
        %739 = vmatprep.subr.bf16.mxu0 0
        %740 = vmatpush1.bf16.msra.mxu0 0
        %741 = vmatprep.subr.bf16.mxu0 0
        %742 = vmatpush1.bf16.msra.mxu0 0
        %743 = vmatprep.subr.bf16.mxu0 0
        %744 = vmatpush1.bf16.msra.mxu0 0
        %745 = vmatprep.subr.bf16.mxu0 0
        %746 = vmatpush1.bf16.msra.mxu0 0
        %747 = vmatprep.subr.bf16.mxu0 0
        %748 = vmatpush1.bf16.msra.mxu0 0
        %749 = vmatprep.subr.bf16.mxu0 0
        %750 = vmatpush1.bf16.msra.mxu0 0
        %751 = vmatprep.subr.bf16.mxu0 0
        %752 = vmatpush1.bf16.msra.mxu0 0
        %753 = vmatprep.subr.bf16.mxu0 0
        %754 = vmatpush1.bf16.msra.mxu0 0
        %755 = vmatprep.subr.bf16.mxu0 0
        %756 = vmatpush1.bf16.msra.mxu0 0
        %757 = vmatprep.subr.bf16.mxu0 0
        %758 = vmatpush1.bf16.msra.mxu0 0
        %759 = vmatprep.subr.bf16.mxu0 0
        %760 = vmatpush1.bf16.msra.mxu0 0
        %761 = vmatprep.subr.bf16.mxu0 0
        %762 = vmatpush1.bf16.msra.mxu0 0
        %763 = vmatprep.subr.bf16.mxu0 0
        %764 = vmatpush1.bf16.msra.mxu0 0
        %765 = vmatprep.mubr.bf16.mxu0 0
        %766 = vmatmul.mubr.bf16.gmra.mrb[0].mxu0 %v731
        %v767 = vpop.f32.mrb[0].mxu0
        %v768 = vadd.f32 %v716, %v767
        %v769 = vpop.f32.mrb[0].mxu0
        %v770 = vpop.f32.mrb[0].mxu0
        %v771 = vpop.f32.mrb[0].mxu0
        %772 = vdwg.mxu0
        %v773 = vld [vmem:[%s6] sm:$0xf]
        %v774 = vld [vmem:[%s6 + $0x4] sm:$0xf]
        %v775 = vld [vmem:[%s6 + $0x8] sm:$0xf]
        %v776 = vld [vmem:[%s6 + $0xc] sm:$0xf]
        %v777 = vld [vmem:[#allocation3] sm:$0x1]
        %v779 = vlaneseq
        %v780 = vshrl.u32 %v779, 7
        %v781 = vsub.s32 0, %v780
        %v782 = vrot.slane %v777, %v781
        %v788 = vunpack.c.l.b16 %v773
        %v789 = vunpack.c.l.b16 %v774
        %v790 = vunpack.c.l.b16 %v775
        %v791 = vunpack.c.l.b16 %v776
        %v792 = vpack.c.b16 %v789, %v788
        %v793 = vpack.c.b16 %v791, %v790
        %796 = vmatprep.subr.bf16.mxu0 0
        %797 = vmatpush1.bf16.msra.mxu0 %v792
        %798 = vmatprep.subr.bf16.mxu0 0
        %799 = vmatpush1.bf16.msra.mxu0 %v793
        %800 = vmatprep.subr.bf16.mxu0 0
        %801 = vmatpush1.bf16.msra.mxu0 0
        %802 = vmatprep.subr.bf16.mxu0 0
        %803 = vmatpush1.bf16.msra.mxu0 0
        %804 = vmatprep.subr.bf16.mxu0 0
        %805 = vmatpush1.bf16.msra.mxu0 0
        %806 = vmatprep.subr.bf16.mxu0 0
        %807 = vmatpush1.bf16.msra.mxu0 0
        %808 = vmatprep.subr.bf16.mxu0 0
        %809 = vmatpush1.bf16.msra.mxu0 0
        %810 = vmatprep.subr.bf16.mxu0 0
        %811 = vmatpush1.bf16.msra.mxu0 0
        %812 = vmatprep.subr.bf16.mxu0 0
        %813 = vmatpush1.bf16.msra.mxu0 0
        %814 = vmatprep.subr.bf16.mxu0 0
        %815 = vmatpush1.bf16.msra.mxu0 0
        %816 = vmatprep.subr.bf16.mxu0 0
        %817 = vmatpush1.bf16.msra.mxu0 0
        %818 = vmatprep.subr.bf16.mxu0 0
        %819 = vmatpush1.bf16.msra.mxu0 0
        %820 = vmatprep.subr.bf16.mxu0 0
        %821 = vmatpush1.bf16.msra.mxu0 0
        %822 = vmatprep.subr.bf16.mxu0 0
        %823 = vmatpush1.bf16.msra.mxu0 0
        %824 = vmatprep.subr.bf16.mxu0 0
        %825 = vmatpush1.bf16.msra.mxu0 0
        %826 = vmatprep.subr.bf16.mxu0 0
        %827 = vmatpush1.bf16.msra.mxu0 0
        %828 = vmatprep.mubr.bf16.mxu0 0
        %829 = vmatmul.mubr.bf16.gmra.mrb[0].mxu0 %v731
        %v830 = vpop.f32.mrb[0].mxu0
        %v831 = vadd.f32 %v782, %v830
        %v832 = vpop.f32.mrb[0].mxu0
        %v833 = vpop.f32.mrb[0].mxu0
        %v834 = vpop.f32.mrb[0].mxu0
        %835 = vdwg.mxu0
        %v836 = vld [vmem:[%s2] sm:$0xf]
        %v837 = vld [vmem:[%s2 + $0x4] sm:$0xf]
        %v838 = vld [vmem:[%s2 + $0x8] sm:$0xf]
        %v839 = vld [vmem:[%s2 + $0xc] sm:$0xf]
        %v840 = vld [vmem:[%s3] sm:$0x1]
        %v842 = vlaneseq
        %v843 = vshrl.u32 %v842, 7
        %v844 = vsub.s32 0, %v843
        %v845 = vrot.slane %v840, %v844
        %v851 = vunpack.c.l.b16 %v836
        %v852 = vunpack.c.l.b16 %v837
        %v853 = vunpack.c.l.b16 %v838
        %v854 = vunpack.c.l.b16 %v839
        %v855 = vpack.c.b16 %v852, %v851
        %v856 = vpack.c.b16 %v854, %v853
        %v860 = vsel %vm661, %v706, 0
        %862 = vmatprep.subr.bf16.mxu0 0
        %863 = vmatpush1.bf16.msra.mxu0 %v855
        %864 = vmatprep.subr.bf16.mxu0 0
        %865 = vmatpush1.bf16.msra.mxu0 %v856
        %866 = vmatprep.subr.bf16.mxu0 0
        %867 = vmatpush1.bf16.msra.mxu0 0
        %868 = vmatprep.subr.bf16.mxu0 0
        %869 = vmatpush1.bf16.msra.mxu0 0
        %870 = vmatprep.subr.bf16.mxu0 0
        %871 = vmatpush1.bf16.msra.mxu0 0
        %872 = vmatprep.subr.bf16.mxu0 0
        %873 = vmatpush1.bf16.msra.mxu0 0
        %874 = vmatprep.subr.bf16.mxu0 0
        %875 = vmatpush1.bf16.msra.mxu0 0
        %876 = vmatprep.subr.bf16.mxu0 0
        %877 = vmatpush1.bf16.msra.mxu0 0
        %878 = vmatprep.subr.bf16.mxu0 0
        %879 = vmatpush1.bf16.msra.mxu0 0
        %880 = vmatprep.subr.bf16.mxu0 0
        %881 = vmatpush1.bf16.msra.mxu0 0
        %882 = vmatprep.subr.bf16.mxu0 0
        %883 = vmatpush1.bf16.msra.mxu0 0
        %884 = vmatprep.subr.bf16.mxu0 0
        %885 = vmatpush1.bf16.msra.mxu0 0
        %886 = vmatprep.subr.bf16.mxu0 0
        %887 = vmatpush1.bf16.msra.mxu0 0
        %888 = vmatprep.subr.bf16.mxu0 0
        %889 = vmatpush1.bf16.msra.mxu0 0
        %890 = vmatprep.subr.bf16.mxu0 0
        %891 = vmatpush1.bf16.msra.mxu0 0
        %892 = vmatprep.subr.bf16.mxu0 0
        %893 = vmatpush1.bf16.msra.mxu0 0
        %894 = vmatprep.mubr.bf16.mxu0 0
        %895 = vmatmul.mubr.bf16.gmra.mrb[0].mxu0 %v860
        %v896 = vpop.f32.mrb[0].mxu0
        %v897 = vadd.f32 %v845, %v896
        %v898 = vpop.f32.mrb[0].mxu0
        %v899 = vpop.f32.mrb[0].mxu0
        %v900 = vpop.f32.mrb[0].mxu0
        %901 = vdwg.mxu0
        %v902 = vmul.f32 %v897, 0.35355338
        %v903 = vpack.c.bf16 %v902, %v902
        %v904 = vpack.c.bf16 %v768, %v768
        %v905 = vpack.c.bf16 %v831, %v831
        %vm906 = vcmp.eq.s32.totalorder %v658, 0
        %v907 = vsel %vm906, -1e+09, 0.0
        %vm908 = vcmask 64512
        %v910 = vsel %vm908, %v903, 0
        %v913 = vsel %vm908, %v904, 0
        %915 = vmatprep.subr.bf16.mxu0 0
        %916 = vmatpush1.bf16.xpose.msra.mxu0 %v913
        %917 = vmatprep.subr.bf16.mxu0 0
        %918 = vmatpush1.bf16.xpose.msra.mxu0 0
        %919 = vmatprep.subr.bf16.mxu0 0
        %920 = vmatpush1.bf16.xpose.msra.mxu0 0
        %921 = vmatprep.subr.bf16.mxu0 0
        %922 = vmatpush1.bf16.xpose.msra.mxu0 0
        %923 = vmatprep.subr.bf16.mxu0 0
        %924 = vmatpush1.bf16.xpose.msra.mxu0 0
        %925 = vmatprep.subr.bf16.mxu0 0
        %926 = vmatpush1.bf16.xpose.msra.mxu0 0
        %927 = vmatprep.subr.bf16.mxu0 0
        %928 = vmatpush1.bf16.xpose.msra.mxu0 0
        %929 = vmatprep.subr.bf16.mxu0 0
        %930 = vmatpush1.bf16.xpose.msra.mxu0 0
        %931 = vmatprep.subr.bf16.mxu0 0
        %932 = vmatpush1.bf16.xpose.msra.mxu0 0
        %933 = vmatprep.subr.bf16.mxu0 0
        %934 = vmatpush1.bf16.xpose.msra.mxu0 0
        %935 = vmatprep.subr.bf16.mxu0 0
        %936 = vmatpush1.bf16.xpose.msra.mxu0 0
        %937 = vmatprep.subr.bf16.mxu0 0
        %938 = vmatpush1.bf16.xpose.msra.mxu0 0
        %939 = vmatprep.subr.bf16.mxu0 0
        %940 = vmatpush1.bf16.xpose.msra.mxu0 0
        %941 = vmatprep.subr.bf16.mxu0 0
        %942 = vmatpush1.bf16.xpose.msra.mxu0 0
        %943 = vmatprep.subr.bf16.mxu0 0
        %944 = vmatpush1.bf16.xpose.msra.mxu0 0
        %945 = vmatprep.subr.bf16.mxu0 0
        %946 = vmatpush1.bf16.xpose.msra.mxu0 0
        %947 = vmatprep.mubr.bf16.mxu0 0
        %948 = vmatmul.mubr.bf16.gmra.mrb[0].mxu0 %v910
        %v949 = vpop.f32.mrb[0].mxu0
        %v950 = vadd.f32 %v907, %v949
        %v951 = vpop.f32.mrb[0].mxu0
        %v952 = vpop.f32.mrb[0].mxu0
        %v953 = vpop.f32.mrb[0].mxu0
        %954 = vdwg.mxu0
        %v955 = vsel %vm908, %v950, -inf
        %956 = vmax.xlane.f32.xlu0 %v955
        %v957 = vpop.xlane.xlu0 %956
        %v958 = vsub.f32 %v950, %v957
        %v959 = vmul.f32 %v958, 1.442695
        %v960 = vpow.pop %v959
        %v961 = vsel %vm908, %v960, 0.0
        %962 = vadd.xlane.f32.xlu0 %v961
        %v963 = vpop.xlane.xlu0 %962
        %v964 = vrcp.pop %v963
        %v965 = vmul.f32 %v960, %v964
        %v966 = vpack.c.bf16 %v965, %v965
        %v968 = vsel %vm908, %v966, 0
        %vm970 = vcmask 1043456
        %v972 = vsel %vm970, %v905, 0
        %974 = vmatprep.subr.bf16.mxu0 0
        %975 = vmatpush1.bf16.msra.mxu0 %v972
        %976 = vmatprep.subr.bf16.mxu0 0
        %977 = vmatpush1.bf16.msra.mxu0 0
        %978 = vmatprep.subr.bf16.mxu0 0
        %979 = vmatpush1.bf16.msra.mxu0 0
        %980 = vmatprep.subr.bf16.mxu0 0
        %981 = vmatpush1.bf16.msra.mxu0 0
        %982 = vmatprep.subr.bf16.mxu0 0
        %983 = vmatpush1.bf16.msra.mxu0 0
        %984 = vmatprep.subr.bf16.mxu0 0
        %985 = vmatpush1.bf16.msra.mxu0 0
        %986 = vmatprep.subr.bf16.mxu0 0
        %987 = vmatpush1.bf16.msra.mxu0 0
        %988 = vmatprep.subr.bf16.mxu0 0
        %989 = vmatpush1.bf16.msra.mxu0 0
        %990 = vmatprep.subr.bf16.mxu0 0
        %991 = vmatpush1.bf16.msra.mxu0 0
        %992 = vmatprep.subr.bf16.mxu0 0
        %993 = vmatpush1.bf16.msra.mxu0 0
        %994 = vmatprep.subr.bf16.mxu0 0
        %995 = vmatpush1.bf16.msra.mxu0 0
        %996 = vmatprep.subr.bf16.mxu0 0
        %997 = vmatpush1.bf16.msra.mxu0 0
        %998 = vmatprep.subr.bf16.mxu0 0
        %999 = vmatpush1.bf16.msra.mxu0 0
        %1000 = vmatprep.subr.bf16.mxu0 0
        %1001 = vmatpush1.bf16.msra.mxu0 0
        %1002 = vmatprep.subr.bf16.mxu0 0
        %1003 = vmatpush1.bf16.msra.mxu0 0
        %1004 = vmatprep.subr.bf16.mxu0 0
        %1005 = vmatpush1.bf16.msra.mxu0 0
        %1006 = vmatprep.mubr.bf16.mxu0 0
        %1007 = vmatmul.mubr.bf16.gmra.mrb[0].mxu0 %v968
        %v1008 = vpop.f32.mrb[0].mxu0
        %v1009 = vadd.f32 0.0, %v1008
        %v1010 = vpop.f32.mrb[0].mxu0
        %v1011 = vpop.f32.mrb[0].mxu0
        %v1012 = vpop.f32.mrb[0].mxu0
        %1013 = vdwg.mxu0
        %1014 = vst.msk [vmem:[#allocation2] sm:$0xff] %vm908, %v1009
        %1016 = vrot.lane.b32.xlu0 %v903, 120
        %v1017 = vpop.permute.xlu0 %1016
        %1019 = vrot.lane.b32.xlu0 %v904, 120
        %v1020 = vpop.permute.xlu0 %1019
        %v1022 = vsel %vm908, %v1017, 0
        %v1025 = vsel %vm908, %v1020, 0
        %1027 = vmatprep.subr.bf16.mxu0 0
        %1028 = vmatpush1.bf16.xpose.msra.mxu0 %v1025
        %1029 = vmatprep.subr.bf16.mxu0 0
        %1030 = vmatpush1.bf16.xpose.msra.mxu0 0
        %1031 = vmatprep.subr.bf16.mxu0 0
        %1032 = vmatpush1.bf16.xpose.msra.mxu0 0
        %1033 = vmatprep.subr.bf16.mxu0 0
        %1034 = vmatpush1.bf16.xpose.msra.mxu0 0
        %1035 = vmatprep.subr.bf16.mxu0 0
        %1036 = vmatpush1.bf16.xpose.msra.mxu0 0
        %1037 = vmatprep.subr.bf16.mxu0 0
        %1038 = vmatpush1.bf16.xpose.msra.mxu0 0
        %1039 = vmatprep.subr.bf16.mxu0 0
        %1040 = vmatpush1.bf16.xpose.msra.mxu0 0
        %1041 = vmatprep.subr.bf16.mxu0 0
        %1042 = vmatpush1.bf16.xpose.msra.mxu0 0
        %1043 = vmatprep.subr.bf16.mxu0 0
        %1044 = vmatpush1.bf16.xpose.msra.mxu0 0
        %1045 = vmatprep.subr.bf16.mxu0 0
        %1046 = vmatpush1.bf16.xpose.msra.mxu0 0
        %1047 = vmatprep.subr.bf16.mxu0 0
        %1048 = vmatpush1.bf16.xpose.msra.mxu0 0
        %1049 = vmatprep.subr.bf16.mxu0 0
        %1050 = vmatpush1.bf16.xpose.msra.mxu0 0
        %1051 = vmatprep.subr.bf16.mxu0 0
        %1052 = vmatpush1.bf16.xpose.msra.mxu0 0
        %1053 = vmatprep.subr.bf16.mxu0 0
        %1054 = vmatpush1.bf16.xpose.msra.mxu0 0
        %1055 = vmatprep.subr.bf16.mxu0 0
        %1056 = vmatpush1.bf16.xpose.msra.mxu0 0
        %1057 = vmatprep.subr.bf16.mxu0 0
        %1058 = vmatpush1.bf16.xpose.msra.mxu0 0
        %1059 = vmatprep.mubr.bf16.mxu0 0
        %1060 = vmatmul.mubr.bf16.gmra.mrb[0].mxu0 %v1022
        %v1061 = vpop.f32.mrb[0].mxu0
        %v1062 = vadd.f32 %v907, %v1061
        %v1063 = vpop.f32.mrb[0].mxu0
        %v1064 = vpop.f32.mrb[0].mxu0
        %v1065 = vpop.f32.mrb[0].mxu0
        %1066 = vdwg.mxu0
        %v1067 = vsel %vm908, %v1062, -inf
        %1068 = vmax.xlane.f32.xlu0 %v1067
        %v1069 = vpop.xlane.xlu0 %1068
        %v1070 = vsub.f32 %v1062, %v1069
        %v1071 = vmul.f32 %v1070, 1.442695
        %v1072 = vpow.pop %v1071
        %v1073 = vsel %vm908, %v1072, 0.0
        %1074 = vadd.xlane.f32.xlu0 %v1073
        %v1075 = vpop.xlane.xlu0 %1074
        %v1076 = vrcp.pop %v1075
        %v1077 = vmul.f32 %v1072, %v1076
        %v1078 = vpack.c.bf16 %v1077, %v1077
        %1080 = vrot.lane.b32.xlu0 %v905, 120
        %v1081 = vpop.permute.xlu0 %1080
        %v1083 = vsel %vm908, %v1078, 0
        %v1086 = vsel %vm970, %v1081, 0
        %1088 = vmatprep.subr.bf16.mxu0 0
        %1089 = vmatpush1.bf16.msra.mxu0 %v1086
        %1090 = vmatprep.subr.bf16.mxu0 0
        %1091 = vmatpush1.bf16.msra.mxu0 0
        %1092 = vmatprep.subr.bf16.mxu0 0
        %1093 = vmatpush1.bf16.msra.mxu0 0
        %1094 = vmatprep.subr.bf16.mxu0 0
        %1095 = vmatpush1.bf16.msra.mxu0 0
        %1096 = vmatprep.subr.bf16.mxu0 0
        %1097 = vmatpush1.bf16.msra.mxu0 0
        %1098 = vmatprep.subr.bf16.mxu0 0
        %1099 = vmatpush1.bf16.msra.mxu0 0
        %1100 = vmatprep.subr.bf16.mxu0 0
        %1101 = vmatpush1.bf16.msra.mxu0 0
        %1102 = vmatprep.subr.bf16.mxu0 0
        %1103 = vmatpush1.bf16.msra.mxu0 0
        %1104 = vmatprep.subr.bf16.mxu0 0
        %1105 = vmatpush1.bf16.msra.mxu0 0
        %1106 = vmatprep.subr.bf16.mxu0 0
        %1107 = vmatpush1.bf16.msra.mxu0 0
        %1108 = vmatprep.subr.bf16.mxu0 0
        %1109 = vmatpush1.bf16.msra.mxu0 0
        %1110 = vmatprep.subr.bf16.mxu0 0
        %1111 = vmatpush1.bf16.msra.mxu0 0
        %1112 = vmatprep.subr.bf16.mxu0 0
        %1113 = vmatpush1.bf16.msra.mxu0 0
        %1114 = vmatprep.subr.bf16.mxu0 0
        %1115 = vmatpush1.bf16.msra.mxu0 0
        %1116 = vmatprep.subr.bf16.mxu0 0
        %1117 = vmatpush1.bf16.msra.mxu0 0
        %1118 = vmatprep.subr.bf16.mxu0 0
        %1119 = vmatpush1.bf16.msra.mxu0 0
        %1120 = vmatprep.mubr.bf16.mxu0 0
        %1121 = vmatmul.mubr.bf16.gmra.mrb[0].mxu0 %v1083
        %v1122 = vpop.f32.mrb[0].mxu0
        %v1123 = vadd.f32 0.0, %v1122
        %v1124 = vpop.f32.mrb[0].mxu0
        %v1125 = vpop.f32.mrb[0].mxu0
        %v1126 = vpop.f32.mrb[0].mxu0
        %1127 = vdwg.mxu0
        %1129 = vrot.lane.b32.xlu0 %v1123, 8
        %v1130 = vpop.permute.xlu0 %1129
        %vm1132 = vcmask 130112
        %1133 = vst.msk [vmem:[#allocation2] sm:$0xff] %vm1132, %v1130
        %1134 = vrot.lane.b32.xlu0 %v903, 112
        %v1135 = vpop.permute.xlu0 %1134
        %1136 = vrot.lane.b32.xlu0 %v904, 112
        %v1137 = vpop.permute.xlu0 %1136
        %v1139 = vsel %vm908, %v1135, 0
        %v1142 = vsel %vm908, %v1137, 0
        %1144 = vmatprep.subr.bf16.mxu0 0
        %1145 = vmatpush1.bf16.xpose.msra.mxu0 %v1142
        %1146 = vmatprep.subr.bf16.mxu0 0
        %1147 = vmatpush1.bf16.xpose.msra.mxu0 0
        %1148 = vmatprep.subr.bf16.mxu0 0
        %1149 = vmatpush1.bf16.xpose.msra.mxu0 0
        %1150 = vmatprep.subr.bf16.mxu0 0
        %1151 = vmatpush1.bf16.xpose.msra.mxu0 0
        %1152 = vmatprep.subr.bf16.mxu0 0
        %1153 = vmatpush1.bf16.xpose.msra.mxu0 0
        %1154 = vmatprep.subr.bf16.mxu0 0
        %1155 = vmatpush1.bf16.xpose.msra.mxu0 0
        %1156 = vmatprep.subr.bf16.mxu0 0
        %1157 = vmatpush1.bf16.xpose.msra.mxu0 0
        %1158 = vmatprep.subr.bf16.mxu0 0
        %1159 = vmatpush1.bf16.xpose.msra.mxu0 0
        %1160 = vmatprep.subr.bf16.mxu0 0
        %1161 = vmatpush1.bf16.xpose.msra.mxu0 0
        %1162 = vmatprep.subr.bf16.mxu0 0
        %1163 = vmatpush1.bf16.xpose.msra.mxu0 0
        %1164 = vmatprep.subr.bf16.mxu0 0
        %1165 = vmatpush1.bf16.xpose.msra.mxu0 0
        %1166 = vmatprep.subr.bf16.mxu0 0
        %1167 = vmatpush1.bf16.xpose.msra.mxu0 0
        %1168 = vmatprep.subr.bf16.mxu0 0
        %1169 = vmatpush1.bf16.xpose.msra.mxu0 0
        %1170 = vmatprep.subr.bf16.mxu0 0
        %1171 = vmatpush1.bf16.xpose.msra.mxu0 0
        %1172 = vmatprep.subr.bf16.mxu0 0
        %1173 = vmatpush1.bf16.xpose.msra.mxu0 0
        %1174 = vmatprep.subr.bf16.mxu0 0
        %1175 = vmatpush1.bf16.xpose.msra.mxu0 0
        %1176 = vmatprep.mubr.bf16.mxu0 0
        %1177 = vmatmul.mubr.bf16.gmra.mrb[0].mxu0 %v1139
        %v1178 = vpop.f32.mrb[0].mxu0
        %v1179 = vadd.f32 %v907, %v1178
        %v1180 = vpop.f32.mrb[0].mxu0
        %v1181 = vpop.f32.mrb[0].mxu0
        %v1182 = vpop.f32.mrb[0].mxu0
        %1183 = vdwg.mxu0
        %v1184 = vsel %vm908, %v1179, -inf
        %1185 = vmax.xlane.f32.xlu0 %v1184
        %v1186 = vpop.xlane.xlu0 %1185
        %v1187 = vsub.f32 %v1179, %v1186
        %v1188 = vmul.f32 %v1187, 1.442695
        %v1189 = vpow.pop %v1188
        %v1190 = vsel %vm908, %v1189, 0.0
        %1191 = vadd.xlane.f32.xlu0 %v1190
        %v1192 = vpop.xlane.xlu0 %1191
        %v1193 = vrcp.pop %v1192
        %v1194 = vmul.f32 %v1189, %v1193
        %v1195 = vpack.c.bf16 %v1194, %v1194
        %1196 = vrot.lane.b32.xlu0 %v905, 112
        %v1197 = vpop.permute.xlu0 %1196
        %v1199 = vsel %vm908, %v1195, 0
        %v1202 = vsel %vm970, %v1197, 0
        %1204 = vmatprep.subr.bf16.mxu0 0
        %1205 = vmatpush1.bf16.msra.mxu0 %v1202
        %1206 = vmatprep.subr.bf16.mxu0 0
        %1207 = vmatpush1.bf16.msra.mxu0 0
        %1208 = vmatprep.subr.bf16.mxu0 0
        %1209 = vmatpush1.bf16.msra.mxu0 0
        %1210 = vmatprep.subr.bf16.mxu0 0
        %1211 = vmatpush1.bf16.msra.mxu0 0
        %1212 = vmatprep.subr.bf16.mxu0 0
        %1213 = vmatpush1.bf16.msra.mxu0 0
        %1214 = vmatprep.subr.bf16.mxu0 0
        %1215 = vmatpush1.bf16.msra.mxu0 0
        %1216 = vmatprep.subr.bf16.mxu0 0
        %1217 = vmatpush1.bf16.msra.mxu0 0
        %1218 = vmatprep.subr.bf16.mxu0 0
        %1219 = vmatpush1.bf16.msra.mxu0 0
        %1220 = vmatprep.subr.bf16.mxu0 0
        %1221 = vmatpush1.bf16.msra.mxu0 0
        %1222 = vmatprep.subr.bf16.mxu0 0
        %1223 = vmatpush1.bf16.msra.mxu0 0
        %1224 = vmatprep.subr.bf16.mxu0 0
        %1225 = vmatpush1.bf16.msra.mxu0 0
        %1226 = vmatprep.subr.bf16.mxu0 0
        %1227 = vmatpush1.bf16.msra.mxu0 0
        %1228 = vmatprep.subr.bf16.mxu0 0
        %1229 = vmatpush1.bf16.msra.mxu0 0
        %1230 = vmatprep.subr.bf16.mxu0 0
        %1231 = vmatpush1.bf16.msra.mxu0 0
        %1232 = vmatprep.subr.bf16.mxu0 0
        %1233 = vmatpush1.bf16.msra.mxu0 0
        %1234 = vmatprep.subr.bf16.mxu0 0
        %1235 = vmatpush1.bf16.msra.mxu0 0
        %1236 = vmatprep.mubr.bf16.mxu0 0
        %1237 = vmatmul.mubr.bf16.gmra.mrb[0].mxu0 %v1199
        %v1238 = vpop.f32.mrb[0].mxu0
        %v1239 = vadd.f32 0.0, %v1238
        %v1240 = vpop.f32.mrb[0].mxu0
        %v1241 = vpop.f32.mrb[0].mxu0
        %v1242 = vpop.f32.mrb[0].mxu0
        %1243 = vdwg.mxu0
        %1245 = vrot.lane.b32.xlu0 %v1239, 16
        %v1246 = vpop.permute.xlu0 %1245
        %vm1248 = vcmask 195712
        %1249 = vst.msk [vmem:[#allocation2] sm:$0xff] %vm1248, %v1246
        %1250 = vrot.lane.b32.xlu0 %v903, 104
        %v1251 = vpop.permute.xlu0 %1250
        %1252 = vrot.lane.b32.xlu0 %v904, 104
        %v1253 = vpop.permute.xlu0 %1252
        %v1255 = vsel %vm908, %v1251, 0
        %v1258 = vsel %vm908, %v1253, 0
        %1260 = vmatprep.subr.bf16.mxu0 0
        %1261 = vmatpush1.bf16.xpose.msra.mxu0 %v1258
        %1262 = vmatprep.subr.bf16.mxu0 0
        %1263 = vmatpush1.bf16.xpose.msra.mxu0 0
        %1264 = vmatprep.subr.bf16.mxu0 0
        %1265 = vmatpush1.bf16.xpose.msra.mxu0 0
        %1266 = vmatprep.subr.bf16.mxu0 0
        %1267 = vmatpush1.bf16.xpose.msra.mxu0 0
        %1268 = vmatprep.subr.bf16.mxu0 0
        %1269 = vmatpush1.bf16.xpose.msra.mxu0 0
        %1270 = vmatprep.subr.bf16.mxu0 0
        %1271 = vmatpush1.bf16.xpose.msra.mxu0 0
        %1272 = vmatprep.subr.bf16.mxu0 0
        %1273 = vmatpush1.bf16.xpose.msra.mxu0 0
        %1274 = vmatprep.subr.bf16.mxu0 0
        %1275 = vmatpush1.bf16.xpose.msra.mxu0 0
        %1276 = vmatprep.subr.bf16.mxu0 0
        %1277 = vmatpush1.bf16.xpose.msra.mxu0 0
        %1278 = vmatprep.subr.bf16.mxu0 0
        %1279 = vmatpush1.bf16.xpose.msra.mxu0 0
        %1280 = vmatprep.subr.bf16.mxu0 0
        %1281 = vmatpush1.bf16.xpose.msra.mxu0 0
        %1282 = vmatprep.subr.bf16.mxu0 0
        %1283 = vmatpush1.bf16.xpose.msra.mxu0 0
        %1284 = vmatprep.subr.bf16.mxu0 0
        %1285 = vmatpush1.bf16.xpose.msra.mxu0 0
        %1286 = vmatprep.subr.bf16.mxu0 0
        %1287 = vmatpush1.bf16.xpose.msra.mxu0 0
        %1288 = vmatprep.subr.bf16.mxu0 0
        %1289 = vmatpush1.bf16.xpose.msra.mxu0 0
        %1290 = vmatprep.subr.bf16.mxu0 0
        %1291 = vmatpush1.bf16.xpose.msra.mxu0 0
        %1292 = vmatprep.mubr.bf16.mxu0 0
        %1293 = vmatmul.mubr.bf16.gmra.mrb[0].mxu0 %v1255
        %v1294 = vpop.f32.mrb[0].mxu0
        %v1295 = vadd.f32 %v907, %v1294
        %v1296 = vpop.f32.mrb[0].mxu0
        %v1297 = vpop.f32.mrb[0].mxu0
        %v1298 = vpop.f32.mrb[0].mxu0
        %1299 = vdwg.mxu0
        %v1300 = vsel %vm908, %v1295, -inf
        %1301 = vmax.xlane.f32.xlu0 %v1300
        %v1302 = vpop.xlane.xlu0 %1301
        %v1303 = vsub.f32 %v1295, %v1302
        %v1304 = vmul.f32 %v1303, 1.442695
        %v1305 = vpow.pop %v1304
        %v1306 = vsel %vm908, %v1305, 0.0
        %1307 = vadd.xlane.f32.xlu0 %v1306
        %v1308 = vpop.xlane.xlu0 %1307
        %v1309 = vrcp.pop %v1308
        %v1310 = vmul.f32 %v1305, %v1309
        %v1311 = vpack.c.bf16 %v1310, %v1310
        %1312 = vrot.lane.b32.xlu0 %v905, 104
        %v1313 = vpop.permute.xlu0 %1312
        %v1315 = vsel %vm908, %v1311, 0
        %v1318 = vsel %vm970, %v1313, 0
        %1320 = vmatprep.subr.bf16.mxu0 0
        %1321 = vmatpush1.bf16.msra.mxu0 %v1318
        %1322 = vmatprep.subr.bf16.mxu0 0
        %1323 = vmatpush1.bf16.msra.mxu0 0
        %1324 = vmatprep.subr.bf16.mxu0 0
        %1325 = vmatpush1.bf16.msra.mxu0 0
        %1326 = vmatprep.subr.bf16.mxu0 0
        %1327 = vmatpush1.bf16.msra.mxu0 0
        %1328 = vmatprep.subr.bf16.mxu0 0
        %1329 = vmatpush1.bf16.msra.mxu0 0
        %1330 = vmatprep.subr.bf16.mxu0 0
        %1331 = vmatpush1.bf16.msra.mxu0 0
        %1332 = vmatprep.subr.bf16.mxu0 0
        %1333 = vmatpush1.bf16.msra.mxu0 0
        %1334 = vmatprep.subr.bf16.mxu0 0
        %1335 = vmatpush1.bf16.msra.mxu0 0
        %1336 = vmatprep.subr.bf16.mxu0 0
        %1337 = vmatpush1.bf16.msra.mxu0 0
        %1338 = vmatprep.subr.bf16.mxu0 0
        %1339 = vmatpush1.bf16.msra.mxu0 0
        %1340 = vmatprep.subr.bf16.mxu0 0
        %1341 = vmatpush1.bf16.msra.mxu0 0
        %1342 = vmatprep.subr.bf16.mxu0 0
        %1343 = vmatpush1.bf16.msra.mxu0 0
        %1344 = vmatprep.subr.bf16.mxu0 0
        %1345 = vmatpush1.bf16.msra.mxu0 0
        %1346 = vmatprep.subr.bf16.mxu0 0
        %1347 = vmatpush1.bf16.msra.mxu0 0
        %1348 = vmatprep.subr.bf16.mxu0 0
        %1349 = vmatpush1.bf16.msra.mxu0 0
        %1350 = vmatprep.subr.bf16.mxu0 0
        %1351 = vmatpush1.bf16.msra.mxu0 0
        %1352 = vmatprep.mubr.bf16.mxu0 0
        %1353 = vmatmul.mubr.bf16.gmra.mrb[0].mxu0 %v1315
        %v1354 = vpop.f32.mrb[0].mxu0
        %v1355 = vadd.f32 0.0, %v1354
        %v1356 = vpop.f32.mrb[0].mxu0
        %v1357 = vpop.f32.mrb[0].mxu0
        %v1358 = vpop.f32.mrb[0].mxu0
        %1359 = vdwg.mxu0
        %1361 = vrot.lane.b32.xlu0 %v1355, 24
        %v1362 = vpop.permute.xlu0 %1361
        %vm1364 = vcmask 261312
        %1365 = vst.msk [vmem:[#allocation2] sm:$0xff] %vm1364, %v1362
        %v1366 = vld [vmem:[#allocation2] sm:$0xff]
        %v1367 = vpack.c.bf16 %v1366, %v1366
        %v1368 = vld [vmem:[#allocation6] sm:$0xf]
        %v1369 = vld [vmem:[#allocation6 + $0x4] sm:$0xf]
        %v1370 = vld [vmem:[#allocation6 + $0x8] sm:$0xf]
        %v1371 = vld [vmem:[#allocation6 + $0xc] sm:$0xf]
        %v1372 = vld [vmem:[#allocation8] sm:$0x1]
        %v1374 = vlaneseq
        %v1375 = vshrl.u32 %v1374, 7
        %v1376 = vsub.s32 0, %v1375
        %v1377 = vrot.slane %v1372, %v1376
        %v1383 = vunpack.c.l.b16 %v1368
        %v1384 = vunpack.c.l.b16 %v1369
        %v1385 = vunpack.c.l.b16 %v1370
        %v1386 = vunpack.c.l.b16 %v1371
        %v1387 = vpack.c.b16 %v1384, %v1383
        %v1388 = vpack.c.b16 %v1386, %v1385
        %v1392 = vsel %vm661, %v1367, 0
        %1394 = vmatprep.subr.bf16.mxu0 0
        %1395 = vmatpush1.bf16.msra.mxu0 %v1387
        %1396 = vmatprep.subr.bf16.mxu0 0
        %1397 = vmatpush1.bf16.msra.mxu0 %v1388
        %1398 = vmatprep.subr.bf16.mxu0 0
        %1399 = vmatpush1.bf16.msra.mxu0 0
        %1400 = vmatprep.subr.bf16.mxu0 0
        %1401 = vmatpush1.bf16.msra.mxu0 0
        %1402 = vmatprep.subr.bf16.mxu0 0
        %1403 = vmatpush1.bf16.msra.mxu0 0
        %1404 = vmatprep.subr.bf16.mxu0 0
        %1405 = vmatpush1.bf16.msra.mxu0 0
        %1406 = vmatprep.subr.bf16.mxu0 0
        %1407 = vmatpush1.bf16.msra.mxu0 0
        %1408 = vmatprep.subr.bf16.mxu0 0
        %1409 = vmatpush1.bf16.msra.mxu0 0
        %1410 = vmatprep.subr.bf16.mxu0 0
        %1411 = vmatpush1.bf16.msra.mxu0 0
        %1412 = vmatprep.subr.bf16.mxu0 0
        %1413 = vmatpush1.bf16.msra.mxu0 0
        %1414 = vmatprep.subr.bf16.mxu0 0
        %1415 = vmatpush1.bf16.msra.mxu0 0
        %1416 = vmatprep.subr.bf16.mxu0 0
        %1417 = vmatpush1.bf16.msra.mxu0 0
        %1418 = vmatprep.subr.bf16.mxu0 0
        %1419 = vmatpush1.bf16.msra.mxu0 0
        %1420 = vmatprep.subr.bf16.mxu0 0
        %1421 = vmatpush1.bf16.msra.mxu0 0
        %1422 = vmatprep.subr.bf16.mxu0 0
        %1423 = vmatpush1.bf16.msra.mxu0 0
        %1424 = vmatprep.subr.bf16.mxu0 0
        %1425 = vmatpush1.bf16.msra.mxu0 0
        %1426 = vmatprep.mubr.bf16.mxu0 0
        %1427 = vmatmul.mubr.bf16.gmra.mrb[0].mxu0 %v1392
        %v1428 = vpop.f32.mrb[0].mxu0
        %v1429 = vadd.f32 %v1377, %v1428
        %v1430 = vpop.f32.mrb[0].mxu0
        %v1431 = vpop.f32.mrb[0].mxu0
        %v1432 = vpop.f32.mrb[0].mxu0
        %1433 = vdwg.mxu0
        %v1434 = vadd.f32 %v657, %v1429
        %v1435 = vld [vmem:[%s16] sm:$0x1]
        %v1436 = vld [vmem:[%s17] sm:$0x1]
        %v1437 = vsel %vm661, %v1434, 0.0
        %1438 = vadd.xlane.f32.xlu0 %v1437
        %v1439 = vpop.xlane.xlu0 %1438
        %v1440 = vmul.f32 %v1439, %v665
        %v1441 = vsub.f32 %v1434, %v1440
        %v1442 = vmul.f32 %v1441, %v1441
        %v1443 = vsel %vm661, %v1442, 0.0
        %1444 = vadd.xlane.f32.xlu0 %v1443
        %v1445 = vpop.xlane.xlu0 %1444
        %v1446 = vmul.f32 %v1445, %v665
        %v1447 = vadd.f32 %v1446, 1e-06
        %v1448 = vrsqrt.pop %v1447
        %v1449 = vmul.f32 %v1441, %v1448
        %v1451 = vlaneseq
        %v1452 = vshrl.u32 %v1451, 7
        %v1453 = vsub.s32 0, %v1452
        %v1454 = vrot.slane %v1435, %v1453
        %v1456 = vmul.f32 %v1449, %v1454
        %v1458 = vlaneseq
        %v1459 = vshrl.u32 %v1458, 7
        %v1460 = vsub.s32 0, %v1459
        %v1461 = vrot.slane %v1436, %v1460
        %v1463 = vadd.f32 %v1456, %v1461
        %v1464 = vpack.c.bf16 %v1463, %v1463
        %v1465 = vld [vmem:[%s10] sm:$0xf]
        %v1466 = vld [vmem:[%s10 + $0x4] sm:$0xf]
        %v1467 = vld [vmem:[%s10 + $0x8] sm:$0xf]
        %v1468 = vld [vmem:[%s10 + $0xc] sm:$0xf]
        %v1469 = vld [vmem:[%s11] sm:$0x1]
        %v1471 = vlaneseq
        %v1472 = vshrl.u32 %v1471, 7
        %v1473 = vsub.s32 0, %v1472
        %v1474 = vrot.slane %v1469, %v1473
        %v1480 = vunpack.c.l.b16 %v1465
        %v1481 = vunpack.c.l.b16 %v1466
        %v1482 = vunpack.c.l.b16 %v1467
        %v1483 = vunpack.c.l.b16 %v1468
        %v1484 = vpack.c.b16 %v1481, %v1480
        %v1485 = vpack.c.b16 %v1483, %v1482
        %v1489 = vsel %vm661, %v1464, 0
        %1491 = vmatprep.subr.bf16.mxu0 0
        %1492 = vmatpush1.bf16.msra.mxu0 %v1484
        %1493 = vmatprep.subr.bf16.mxu0 0
        %1494 = vmatpush1.bf16.msra.mxu0 %v1485
        %1495 = vmatprep.subr.bf16.mxu0 0
        %1496 = vmatpush1.bf16.msra.mxu0 0
        %1497 = vmatprep.subr.bf16.mxu0 0
        %1498 = vmatpush1.bf16.msra.mxu0 0
        %1499 = vmatprep.subr.bf16.mxu0 0
        %1500 = vmatpush1.bf16.msra.mxu0 0
        %1501 = vmatprep.subr.bf16.mxu0 0
        %1502 = vmatpush1.bf16.msra.mxu0 0
        %1503 = vmatprep.subr.bf16.mxu0 0
        %1504 = vmatpush1.bf16.msra.mxu0 0
        %1505 = vmatprep.subr.bf16.mxu0 0
        %1506 = vmatpush1.bf16.msra.mxu0 0
        %1507 = vmatprep.subr.bf16.mxu0 0
        %1508 = vmatpush1.bf16.msra.mxu0 0
        %1509 = vmatprep.subr.bf16.mxu0 0
        %1510 = vmatpush1.bf16.msra.mxu0 0
        %1511 = vmatprep.subr.bf16.mxu0 0
        %1512 = vmatpush1.bf16.msra.mxu0 0
        %1513 = vmatprep.subr.bf16.mxu0 0
        %1514 = vmatpush1.bf16.msra.mxu0 0
        %1515 = vmatprep.subr.bf16.mxu0 0
        %1516 = vmatpush1.bf16.msra.mxu0 0
        %1517 = vmatprep.subr.bf16.mxu0 0
        %1518 = vmatpush1.bf16.msra.mxu0 0
        %1519 = vmatprep.subr.bf16.mxu0 0
        %1520 = vmatpush1.bf16.msra.mxu0 0
        %1521 = vmatprep.subr.bf16.mxu0 0
        %1522 = vmatpush1.bf16.msra.mxu0 0
        %1523 = vmatprep.mubr.bf16.mxu0 0
        %1524 = vmatmul.mubr.bf16.gmra.mrb[0].mxu0 %v1489
        %v1525 = vpop.f32.mrb[0].mxu0
        %v1526 = vadd.f32 %v1474, %v1525
        %v1527 = vpop.f32.mrb[0].mxu0
        %v1528 = vpop.f32.mrb[0].mxu0
        %v1529 = vpop.f32.mrb[0].mxu0
        %1530 = vdwg.mxu0
        %v1531 = vmax.f32 %v1526, 0.0
        %v1532 = vpack.c.bf16 %v1531, %v1531
        %v1533 = vld [vmem:[%s12] sm:$0xf]
        %v1534 = vld [vmem:[%s12 + $0x4] sm:$0xf]
        %v1535 = vld [vmem:[%s12 + $0x8] sm:$0xf]
        %v1536 = vld [vmem:[%s12 + $0xc] sm:$0xf]
        %v1537 = vld [vmem:[%s12 + $0x10] sm:$0xf]
        %v1538 = vld [vmem:[%s12 + $0x14] sm:$0xf]
        %v1539 = vld [vmem:[%s12 + $0x18] sm:$0xf]
        %v1540 = vld [vmem:[%s12 + $0x1c] sm:$0xf]
        %v1541 = vld [vmem:[%s12 + $0x20] sm:$0xf]
        %v1542 = vld [vmem:[%s12 + $0x24] sm:$0xf]
        %v1543 = vld [vmem:[%s12 + $0x28] sm:$0xf]
        %v1544 = vld [vmem:[%s12 + $0x2c] sm:$0xf]
        %v1545 = vld [vmem:[%s12 + $0x30] sm:$0xf]
        %v1546 = vld [vmem:[%s12 + $0x34] sm:$0xf]
        %v1547 = vld [vmem:[%s12 + $0x38] sm:$0xf]
        %v1548 = vld [vmem:[%s12 + $0x3c] sm:$0xf]
        %v1549 = vld [vmem:[%s13] sm:$0x1]
        %v1551 = vlaneseq
        %v1552 = vshrl.u32 %v1551, 7
        %v1553 = vsub.s32 0, %v1552
        %v1554 = vrot.slane %v1549, %v1553
        %v1572 = vunpack.c.l.b16 %v1533
        %v1573 = vunpack.c.l.b16 %v1534
        %v1574 = vunpack.c.l.b16 %v1535
        %v1575 = vunpack.c.l.b16 %v1536
        %v1576 = vunpack.c.l.b16 %v1537
        %v1577 = vunpack.c.l.b16 %v1538
        %v1578 = vunpack.c.l.b16 %v1539
        %v1579 = vunpack.c.l.b16 %v1540
        %v1580 = vunpack.c.l.b16 %v1541
        %v1581 = vunpack.c.l.b16 %v1542
        %v1582 = vunpack.c.l.b16 %v1543
        %v1583 = vunpack.c.l.b16 %v1544
        %v1584 = vunpack.c.l.b16 %v1545
        %v1585 = vunpack.c.l.b16 %v1546
        %v1586 = vunpack.c.l.b16 %v1547
        %v1587 = vunpack.c.l.b16 %v1548
        %v1588 = vpack.c.b16 %v1573, %v1572
        %v1589 = vpack.c.b16 %v1575, %v1574
        %v1590 = vpack.c.b16 %v1577, %v1576
        %v1591 = vpack.c.b16 %v1579, %v1578
        %v1592 = vpack.c.b16 %v1581, %v1580
        %v1593 = vpack.c.b16 %v1583, %v1582
        %v1594 = vpack.c.b16 %v1585, %v1584
        %v1595 = vpack.c.b16 %v1587, %v1586
        %1604 = vmatprep.subr.bf16.mxu0 0
        %1605 = vmatpush1.bf16.msra.mxu0 %v1588
        %1606 = vmatprep.subr.bf16.mxu0 0
        %1607 = vmatpush1.bf16.msra.mxu0 %v1589
        %1608 = vmatprep.subr.bf16.mxu0 0
        %1609 = vmatpush1.bf16.msra.mxu0 %v1590
        %1610 = vmatprep.subr.bf16.mxu0 0
        %1611 = vmatpush1.bf16.msra.mxu0 %v1591
        %1612 = vmatprep.subr.bf16.mxu0 0
        %1613 = vmatpush1.bf16.msra.mxu0 %v1592
        %1614 = vmatprep.subr.bf16.mxu0 0
        %1615 = vmatpush1.bf16.msra.mxu0 %v1593
        %1616 = vmatprep.subr.bf16.mxu0 0
        %1617 = vmatpush1.bf16.msra.mxu0 %v1594
        %1618 = vmatprep.subr.bf16.mxu0 0
        %1619 = vmatpush1.bf16.msra.mxu0 %v1595
        %1620 = vmatprep.subr.bf16.mxu0 0
        %1621 = vmatpush1.bf16.msra.mxu0 0
        %1622 = vmatprep.subr.bf16.mxu0 0
        %1623 = vmatpush1.bf16.msra.mxu0 0
        %1624 = vmatprep.subr.bf16.mxu0 0
        %1625 = vmatpush1.bf16.msra.mxu0 0
        %1626 = vmatprep.subr.bf16.mxu0 0
        %1627 = vmatpush1.bf16.msra.mxu0 0
        %1628 = vmatprep.subr.bf16.mxu0 0
        %1629 = vmatpush1.bf16.msra.mxu0 0
        %1630 = vmatprep.subr.bf16.mxu0 0
        %1631 = vmatpush1.bf16.msra.mxu0 0
        %1632 = vmatprep.subr.bf16.mxu0 0
        %1633 = vmatpush1.bf16.msra.mxu0 0
        %1634 = vmatprep.subr.bf16.mxu0 0
        %1635 = vmatpush1.bf16.msra.mxu0 0
        %1636 = vmatprep.mubr.bf16.mxu0 0
        %1637 = vmatmul.mubr.bf16.gmra.mrb[0].mxu0 %v1532
        %v1638 = vpop.f32.mrb[0].mxu0
        %v1639 = vadd.f32 %v1554, %v1638
        %v1640 = vpop.f32.mrb[0].mxu0
        %v1641 = vpop.f32.mrb[0].mxu0
        %v1642 = vpop.f32.mrb[0].mxu0
        %1643 = vdwg.mxu0
        %v1644 = vadd.f32 %v1434, %v1639
        %1645 = vst.msk [vmem:[%s641] sm:$0xff] %vm661, %v1644
        %s1646 = sand.u32 %s446, 1
        %s1647 = scalar_lea.sflag [#allocation5], %s1646
        %s1648 = sand.u32 %s446, 1
        %s1649 = smul.addr %s1648, 8
        %s1650 = scalar_lea.vmem [#allocation9], %s1649
        // Predicated region
        $region105: #{tpu_custom_call.1} parent=91 // pred_check
          %p1651 = pneg %p456
        $region106: #{tpu_custom_call.1} parent=91 // pred_check_branch
          %1653 = sbr.rel (%p1651) target = $region108
        $region107: #{tpu_custom_call.1} parent=91 // pred_region
          %s1655 = ssub.s32 128, 128
          %1656 = vsyncadd %s1647, %s1655
          %s1657 = sadd.s32 %s39, %s38
          %s1658 = smul.addr %s1657, 128
          %s1659 = scalar_lea.hbm %s18, %s1658
          %s1661 = sshll.u32 %s1650, 4
          %s1662 = int_to_ptr.vmem [resolvable:$true] %s1661
          %1664 = dma.vmem_to_hbm [thread:$0]  %s1662, 128, %s1659, %s1647
        $region108: #{tpu_custom_call.1} parent=91 // pred_fallthru
          _
      $region92: #{tpu_custom_call.1} parent=5 // pred_fallthru
        _
      %p1665 = scmp.le.s32.totalorder 2, %s29
      // Predicated region
      $region109: #{tpu_custom_call.1} parent=5 // pred_check
        %p1666 = pneg %p1665
      $region110: #{tpu_custom_call.1} parent=5 // pred_check_branch
        %1668 = sbr.rel (%p1666) target = $region112
      $region111: #{tpu_custom_call.1} parent=5 // pred_region
        %s1669 = ssub.s32 %s29, 2
        // Predicated region
        $region113: #{tpu_custom_call.1} parent=111 // pred_check
          %p1670 = pneg %p462
        $region114: #{tpu_custom_call.1} parent=111 // pred_check_branch
          %1672 = sbr.rel (%p1670) target = $region116
        $region115: #{tpu_custom_call.1} parent=111 // pred_region
          %s1673 = sand.u32 %s447, 1
          %s1674 = scalar_lea.sflag [#allocation5], %s1673
          %s1675 = sand.u32 %s447, 1
          %s1676 = smul.addr %s1675, 8
          %s1677 = scalar_lea.vmem [#allocation9], %s1676
          %1678 = dma.done %s1674, 128
        $region116: #{tpu_custom_call.1} parent=111 // pred_fallthru
          _
      $region112: #{tpu_custom_call.1} parent=5 // pred_fallthru
        _
    $region6: #{tpu_custom_call.1} parent=1 // loop_footer
      %s33 = sadd.s32 1, %s29
    $region7: #{tpu_custom_call.1} parent=1 // loop_footer_branch
      %28 = sbr.rel target = $region3
    $region8: #{tpu_custom_call.1} parent=1 // loop_exit
      _
    %1679 = vsyncpa [#allocation4], 1
    %s1680 = scalar_lea.sflag [#allocation4], 1
    %1681 = vsyncpa %s1680, 1
    %1682 = vsyncpa [#allocation7], 1
    %1683 = vsyncpa [#allocation5], 1
    %s1684 = scalar_lea.sflag [#allocation5], 1
    %1685 = vsyncpa %s1684, 1

</llo_original>
